<compile_context>
chip_gen: v7x
topology: tpu7x:2x2x1
jax: 0.10.0
libtpu: 0.0.40
codegen_flags: <defaults>
</compile_context>

<pallas_src>
import math

import jax
import jax.numpy as jnp
from jax import lax
from jax.experimental import pallas as pl
from jax.experimental.pallas import tpu as pltpu


def _make_tcn_kernel(T, C_in0, C_out, K, dilations, num_groups, eps,
                     Bt, has_down, has_rest):
    """Fused TCN forward. All shapes / dilations are static Python values."""
    NL = len(dilations)
    half = K // 2
    CL_out = Bt * C_out

    def kernel(*refs):
        i = 0
        x_ref = refs[i]; i += 1            # (1, T, Bt*C_in0)          f32
        w0_ref = refs[i]; i += 1           # (K, Bt*C_in0, CL_out)     bf16
        wd0_ref = None
        if has_down:
            wd0_ref = refs[i]; i += 1      # (Bt*C_in0, CL_out)        bf16
        wr_ref = None
        if has_rest:
            wr_ref = refs[i]; i += 1       # (NL-1, K, CL_out, CL_out) bf16
        scal_ref = refs[i]; i += 1         # (NL*4, CL_out) f32: bias,gamma,beta,bd
        pool_ref = refs[i]; i += 1         # (CL_out, CL_out) f32 block-diag/(gsize*T)
        out_ref = refs[i]                  # (1, T, CL_out)

        pool = pool_ref[...]
        # time index of each sublane row (for the conv zero-padding masks)
        t_idx = lax.broadcasted_iota(jnp.int32, (T, 1), 0)

        x = x_ref[0].astype(jnp.float32)   # (T, Bt*C_in)  lane-packed batch

        for l in range(NL):
            d = dilations[l]
            b_row = scal_ref[4 * l + 0:4 * l + 1, :]      # (1, CL_out)
            g_row = scal_ref[4 * l + 1:4 * l + 2, :]
            be_row = scal_ref[4 * l + 2:4 * l + 3, :]

            x_bf = x.astype(jnp.bfloat16)

            # ---- dilated Conv1d: K time-shifted taps built with XLU rolls
            #      (+ zero-pad masks), each contracted against its
            #      block-diagonal weight slice on the MXU (bf16 in, f32 acc) ----
            acc = None
            for k in range(K):
                off = (k - half) * d
                if off != 0 and abs(off) >= T:
                    continue                              # tap entirely in padding
                if off == 0:
                    tap = x_bf
                elif off < 0:                             # tap[t] = x[t - |off|]
                    s = -off
                    rolled = pltpu.roll(x, s, axis=0)
                    tap = jnp.where(t_idx >= s, rolled, 0.0).astype(jnp.bfloat16)
                else:                                     # tap[t] = x[t + off]
                    rolled = pltpu.roll(x, T - off, axis=0)
                    tap = jnp.where(t_idx < T - off, rolled, 0.0).astype(jnp.bfloat16)
                w_k = w0_ref[k] if l == 0 else wr_ref[l - 1, k]
                term = jnp.dot(tap, w_k, preferred_element_type=jnp.float32)
                acc = term if acc is None else acc + term
            acc = acc + b_row                             # (T, CL_out)

            # ---- GroupNorm(num_groups): one-pass per-(sample, group) stats.
            #      pool is block-diagonal with value 1/(gsize*T): the matmul
            #      does the in-group lane pooling, the sublane sum pools T. ----
            gp1 = jnp.dot(acc, pool, preferred_element_type=jnp.float32)
            gp2 = jnp.dot(acc * acc, pool, preferred_element_type=jnp.float32)
            mean = jnp.sum(gp1, axis=0, keepdims=True)    # (1, CL_out)
            ex2 = jnp.sum(gp2, axis=0, keepdims=True)
            var = jnp.maximum(ex2 - mean * mean, 0.0)
            rstd = lax.rsqrt(var + eps)
            scale = rstd * g_row
            shift = be_row - mean * scale
            y = acc * scale + shift

            # ---- SiLU ----
            act = y * jax.nn.sigmoid(y)

            # ---- residual: 1x1 downsample conv on layer 0, identity otherwise
            if l == 0 and has_down:
                bd_row = scal_ref[3:4, :]
                ident = jnp.dot(x_bf, wd0_ref[...],
                                preferred_element_type=jnp.float32) + bd_row
            else:
                ident = x
            x = act + ident                               # next layer input

        out_ref[0] = x.astype(out_ref.dtype)

    return kernel


def tcn2_forward(x, params_list, kernel_size=3, dilation_growth=2,
                 num_groups=8, eps=1e-5):
    """TemporalConvolutionalNetwork2.forward. x: (B, T, input_dim) -> (B, T, output_dim)."""
    B, T, C_in0 = x.shape
    NL = len(params_list)
    K = kernel_size
    assert K % 2 == 1, "kernel_size must be odd (module preserves seq length)"
    C_out = params_list[0][0].shape[0]
    assert C_out % num_groups == 0
    gsize = C_out // num_groups
    dilations = [dilation_growth ** i for i in range(NL)]

    wd0 = params_list[0][4]
    has_down = wd0 is not None
    has_rest = NL > 1
    if not has_down:
        assert C_in0 == C_out, "layer-0 identity residual needs input_dim == output_dim"

    # ---- lane packing: Bt batch samples side by side on the lane axis ----
    Bt = min(B, max(1, 128 // C_out))
    nchunks = -(-B // Bt)
    Bpad = nchunks * Bt
    xf = x.astype(jnp.float32)
    if Bpad != B:
        xf = jnp.concatenate(
            [xf, jnp.zeros((Bpad - B, T, C_in0), jnp.float32)], axis=0)
    # (Bpad, T, C) -> (nchunks, T, Bt*C): wrapper-side layout plumbing
    xp = xf.reshape(nchunks, Bt, T, C_in0).transpose(0, 2, 1, 3) \
           .reshape(nchunks, T, Bt * C_in0)

    CL_in0 = Bt * C_in0
    CL_out = Bt * C_out
    eye_bt = jnp.eye(Bt, dtype=jnp.float32)

    def pack_conv_w(w):
        # (C_out, C_in, K) -> (K, Bt*C_in, Bt*C_out) block-diag over samples, bf16
        Co, Ci, Kk = w.shape
        wt = jnp.transpose(w, (2, 1, 0))                      # (K, C_in, C_out)
        wb = jnp.einsum('ab,kco->kacbo', eye_bt, wt)
        return wb.reshape(Kk, Bt * Ci, Bt * Co).astype(jnp.bfloat16)

    inputs = [xp, pack_conv_w(params_list[0][0])]
    in_specs = [pl.BlockSpec((1, T, CL_in0), lambda i: (i, 0, 0)),
                pl.BlockSpec((K, CL_in0, CL_out), lambda i: (0, 0, 0))]
    if has_down:
        wdb = jnp.einsum('ab,co->acbo', eye_bt, wd0.T) \
                 .reshape(CL_in0, CL_out).astype(jnp.bfloat16)
        inputs.append(wdb)
        in_specs.append(pl.BlockSpec((CL_in0, CL_out), lambda i: (0, 0)))
    if has_rest:
        Wr = jnp.stack([pack_conv_w(p[0]) for p in params_list[1:]], axis=0)
        inputs.append(Wr)                                     # (NL-1, K, CL_out, CL_out)
        in_specs.append(pl.BlockSpec((NL - 1, K, CL_out, CL_out),
                                     lambda i: (0, 0, 0, 0)))

    # per-channel scalars tiled across the Bt lane-packed samples:
    #   rows 4l..4l+3 = conv bias, gamma, beta, downsample bias (layer 0 only)
    zeros_c = jnp.zeros((C_out,), jnp.float32)
    rows = []
    for l, (w, b, gamma, beta, wd, bd) in enumerate(params_list):
        bd_row = bd if (l == 0 and bd is not None) else zeros_c
        rows += [b, gamma, beta, bd_row]
    scal = jnp.tile(jnp.stack(rows, axis=0).astype(jnp.float32), (1, Bt))
    inputs.append(scal)
    in_specs.append(pl.BlockSpec((NL * 4, CL_out), lambda i: (0, 0)))

    # block-diagonal GroupNorm pooling matrix: 1/(gsize*T) where two lanes
    # belong to the same (sample, group); constant across layers.
    blk = jnp.arange(CL_out, dtype=jnp.int32) // gsize
    pool = jnp.where(blk[:, None] == blk[None, :],
                     jnp.float32(1.0 / (gsize * T)), jnp.float32(0.0))
    inputs.append(pool)
    in_specs.append(pl.BlockSpec((CL_out, CL_out), lambda i: (0, 0)))

    kernel = _make_tcn_kernel(T, C_in0, C_out, K, dilations, num_groups, eps,
                              Bt, has_down, has_rest)

    # NOTE: for very large T / C_out on v7x (64 MiB VMEM), shrink the time tile
    # and single-buffer the constant-index weight specs (pipeline_mode=pl.Buffered(1)).
    out = pl.pallas_call(
        kernel,
        out_shape=jax.ShapeDtypeStruct((nchunks, T, CL_out), jnp.float32),
        grid=(nchunks,),
        in_specs=in_specs,
        out_specs=pl.BlockSpec((1, T, CL_out), lambda i: (i, 0, 0)),
        compiler_params=pltpu.CompilerParams(
            dimension_semantics=("parallel",)),
    )(*inputs)

    # unpack lanes back to (B, T, C_out)
    out = out.reshape(nchunks, T, Bt, C_out).transpose(0, 2, 1, 3) \
             .reshape(Bpad, T, C_out)
    return out[:B]


# ---------------- pure-JAX reference (mirrors the PyTorch module) ----------------

def _ref_block(x_ct, params, K, d, num_groups=8, eps=1e-5):
    w, b, gamma, beta, wd, bd = params
    pad = (K // 2) * d
    out = lax.conv_general_dilated(
        x_ct, w, window_strides=(1,), padding=[(pad, pad)], rhs_dilation=(d,),
        dimension_numbers=("NCH", "OIH", "NCH"), precision=lax.Precision.HIGHEST)
    out = out + b[None, :, None]
    Bn, C, T = out.shape
    g = out.reshape(Bn, num_groups, C // num_groups, T)
    mean = g.mean(axis=(2, 3), keepdims=True)
    var = g.var(axis=(2, 3), keepdims=True)
    out = ((g - mean) * lax.rsqrt(var + eps)).reshape(Bn, C, T)
    out = out * gamma[None, :, None] + beta[None, :, None]
    out = out * jax.nn.sigmoid(out)
    if wd is not None:
        ident = jnp.einsum("oc,bct->bot", wd, x_ct,
                           precision=lax.Precision.HIGHEST) + bd[None, :, None]
    else:
        ident = x_ct
    return out + ident


def tcn2_reference(x, params_list, kernel_size=3, dilation_growth=2):
    xc = jnp.transpose(x, (0, 2, 1))
    d = 1
    for p in params_list:
        xc = _ref_block(xc, p, kernel_size, d)
        d *= dilation_growth
    return jnp.transpose(xc, (0, 2, 1))


# ---------------- synthetic parameter init (matches module's shapes) ----------------

def init_tcn2_params(key, input_dim, output_dim, kernel_size=3, num_layers=5):
    params = []
    for i in range(num_layers):
        in_ch = input_dim if i == 0 else output_dim
        key, kw, kb, kdw, kdb = jax.random.split(key, 5)
        bound = 1.0 / math.sqrt(in_ch * kernel_size)
        w = jax.random.uniform(kw, (output_dim, in_ch, kernel_size),
                               jnp.float32, -bound, bound)
        b = jax.random.uniform(kb, (output_dim,), jnp.float32, -bound, bound)
        gamma = jnp.ones((output_dim,), jnp.float32)
        beta = jnp.zeros((output_dim,), jnp.float32)
        if in_ch != output_dim:                       # downsample 1x1 conv
            dbound = 1.0 / math.sqrt(in_ch)
            wd = jax.random.uniform(kdw, (output_dim, in_ch), jnp.float32,
                                    -dbound, dbound)
            bd = jax.random.uniform(kdb, (output_dim,), jnp.float32,
                                    -dbound, dbound)
        else:                                         # nn.Identity
            wd, bd = None, None
        params.append((w, b, gamma, beta, wd, bd))
    return params


if __name__ == "__main__":
    key = jax.random.PRNGKey(0)
    k_x, k_p = jax.random.split(key)

    B, T = 2, 16
    input_dim, output_dim = 16, 32
    kernel_size, num_layers = 3, 5

    x = jax.random.normal(k_x, (B, T, input_dim), jnp.float32)
    params = init_tcn2_params(k_p, input_dim, output_dim, kernel_size, num_layers)

    out = tcn2_forward(x, params, kernel_size=kernel_size)
    out = jax.block_until_ready(out)
    assert out.shape == (B, T, output_dim), out.shape
    assert bool(jnp.all(jnp.isfinite(out)))

    ref = tcn2_reference(x, params, kernel_size=kernel_size)
    abs_err = float(jnp.max(jnp.abs(out - ref)))
    scale = float(jnp.max(jnp.abs(ref))) + 1.0
    # bf16 MXU operands (f32 accumulate) -> allow a small relative tolerance
    assert abs_err / scale < 5e-2, (abs_err, scale)

    print("KERNEL_OK")
</pallas_src>

<mosaic_0001>
module attributes {stable_mosaic.version = 11 : i64} {
  func.func @kernel(%arg0: i32, %arg1: memref<1x16x32xf32, #tpu.memory_space<vmem>>, %arg2: memref<3x32x64xbf16, #tpu.memory_space<vmem>>, %arg3: memref<32x64xbf16, #tpu.memory_space<vmem>>, %arg4: memref<4x3x64x64xbf16, #tpu.memory_space<vmem>>, %arg5: memref<20x64xf32, #tpu.memory_space<vmem>>, %arg6: memref<64x64xf32, #tpu.memory_space<vmem>>, %arg7: memref<1x16x64xf32, #tpu.memory_space<vmem>>) attributes {dimension_semantics = [#tpu.dimension_semantics<parallel>], iteration_bounds = array<i64: 1>, scalar_prefetch = 0 : i64, scratch_operands = 0 : i64, tpu.core_type = #tpu.core_type<tc>, window_params = [{transform_indices = @transform_0, window_bounds = array<i64: 1, 16, 32>}, {pipeline_mode = #tpu.pipeline_mode<synchronous>, transform_indices = @transform_1, window_bounds = array<i64: 3, 32, 64>}, {pipeline_mode = #tpu.pipeline_mode<synchronous>, transform_indices = @transform_2, window_bounds = array<i64: 32, 64>}, {pipeline_mode = #tpu.pipeline_mode<synchronous>, transform_indices = @transform_3, window_bounds = array<i64: 4, 3, 64, 64>}, {pipeline_mode = #tpu.pipeline_mode<synchronous>, transform_indices = @transform_4, window_bounds = array<i64: 20, 64>}, {pipeline_mode = #tpu.pipeline_mode<synchronous>, transform_indices = @transform_5, window_bounds = array<i64: 64, 64>}, {transform_indices = @transform_6, window_bounds = array<i64: 1, 16, 64>}]} {
    %c0 = arith.constant 0 : index
    %c0_0 = arith.constant 0 : index
    %0 = vector.load %arg6[%c0, %c0_0] : memref<64x64xf32, #tpu.memory_space<vmem>>, vector<64x64xf32>
    %1 = tpu.iota {dimensions = array<i32: 0>} : vector<16x1xi32>
    %c0_1 = arith.constant 0 : index
    %c0_2 = arith.constant 0 : index
    %c0_3 = arith.constant 0 : index
    %2 = vector.load %arg1[%c0_1, %c0_2, %c0_3] : memref<1x16x32xf32, #tpu.memory_space<vmem>>, vector<1x16x32xf32>
    %3 = vector.shape_cast %2 : vector<1x16x32xf32> to vector<16x32xf32>
    %c0_4 = arith.constant 0 : index
    %c0_5 = arith.constant 0 : index
    %4 = vector.load %arg5[%c0_4, %c0_5] : memref<20x64xf32, #tpu.memory_space<vmem>>, vector<1x64xf32>
    %c1 = arith.constant 1 : index
    %c0_6 = arith.constant 0 : index
    %5 = vector.load %arg5[%c1, %c0_6] : memref<20x64xf32, #tpu.memory_space<vmem>>, vector<1x64xf32>
    %c2 = arith.constant 2 : index
    %c0_7 = arith.constant 0 : index
    %6 = vector.load %arg5[%c2, %c0_7] : memref<20x64xf32, #tpu.memory_space<vmem>>, vector<1x64xf32>
    %7 = arith.truncf %3 : vector<16x32xf32> to vector<16x32xbf16>
    %c1_i32 = arith.constant 1 : i32
    %8 = tpu.dynamic_rotate %3 by %c1_i32 dim 0 : vector<16x32xf32>, i32 -> vector<16x32xf32>
    %c1_i32_8 = arith.constant 1 : i32
    %9 = vector.broadcast %c1_i32_8 : i32 to vector<16x1xi32>
    %10 = arith.cmpi sge, %1, %9 : vector<16x1xi32>
    %cst = arith.constant 0.000000e+00 : f32
    %11 = vector.shape_cast %10 : vector<16x1xi1> to vector<16x1xi1>
    %12 = vector.broadcast %11 : vector<16x1xi1> to vector<16x32xi1>
    %13 = vector.broadcast %cst : f32 to vector<16x32xf32>
    %14 = arith.select %12, %8, %13 : vector<16x32xi1>, vector<16x32xf32>
    %15 = arith.truncf %14 : vector<16x32xf32> to vector<16x32xbf16>
    %c0_9 = arith.constant 0 : index
    %c0_10 = arith.constant 0 : index
    %c0_11 = arith.constant 0 : index
    %16 = vector.load %arg2[%c0_9, %c0_10, %c0_11] : memref<3x32x64xbf16, #tpu.memory_space<vmem>>, vector<1x32x64xbf16>
    %17 = vector.shape_cast %16 : vector<1x32x64xbf16> to vector<32x64xbf16>
    %cst_12 = arith.constant dense<0.000000e+00> : vector<16x64xf32>
    %18 = tpu.matmul %15, %17, %cst_12 {dimension_numbers = #tpu.dot_dimension_numbers<[1], [0], [0], [1], [0, 0, 1, 1], [], []>} : vector<16x32xbf16>, vector<32x64xbf16>, vector<16x64xf32> -> vector<16x64xf32>
    %c1_13 = arith.constant 1 : index
    %c0_14 = arith.constant 0 : index
    %c0_15 = arith.constant 0 : index
    %19 = vector.load %arg2[%c1_13, %c0_14, %c0_15] : memref<3x32x64xbf16, #tpu.memory_space<vmem>>, vector<1x32x64xbf16>
    %20 = vector.shape_cast %19 : vector<1x32x64xbf16> to vector<32x64xbf16>
    %cst_16 = arith.constant dense<0.000000e+00> : vector<16x64xf32>
    %21 = tpu.matmul %7, %20, %cst_16 {dimension_numbers = #tpu.dot_dimension_numbers<[1], [0], [0], [1], [0, 0, 1, 1], [], []>} : vector<16x32xbf16>, vector<32x64xbf16>, vector<16x64xf32> -> vector<16x64xf32>
    %22 = arith.addf %18, %21 : vector<16x64xf32>
    %c15_i32 = arith.constant 15 : i32
    %23 = tpu.dynamic_rotate %3 by %c15_i32 dim 0 : vector<16x32xf32>, i32 -> vector<16x32xf32>
    %c15_i32_17 = arith.constant 15 : i32
    %24 = vector.broadcast %c15_i32_17 : i32 to vector<16x1xi32>
    %25 = arith.cmpi slt, %1, %24 : vector<16x1xi32>
    %cst_18 = arith.constant 0.000000e+00 : f32
    %26 = vector.shape_cast %25 : vector<16x1xi1> to vector<16x1xi1>
    %27 = vector.broadcast %26 : vector<16x1xi1> to vector<16x32xi1>
    %28 = vector.broadcast %cst_18 : f32 to vector<16x32xf32>
    %29 = arith.select %27, %23, %28 : vector<16x32xi1>, vector<16x32xf32>
    %30 = arith.truncf %29 : vector<16x32xf32> to vector<16x32xbf16>
    %c2_19 = arith.constant 2 : index
    %c0_20 = arith.constant 0 : index
    %c0_21 = arith.constant 0 : index
    %31 = vector.load %arg2[%c2_19, %c0_20, %c0_21] : memref<3x32x64xbf16, #tpu.memory_space<vmem>>, vector<1x32x64xbf16>
    %32 = vector.shape_cast %31 : vector<1x32x64xbf16> to vector<32x64xbf16>
    %cst_22 = arith.constant dense<0.000000e+00> : vector<16x64xf32>
    %33 = tpu.matmul %30, %32, %cst_22 {dimension_numbers = #tpu.dot_dimension_numbers<[1], [0], [0], [1], [0, 0, 1, 1], [], []>} : vector<16x32xbf16>, vector<32x64xbf16>, vector<16x64xf32> -> vector<16x64xf32>
    %34 = arith.addf %22, %33 : vector<16x64xf32>
    %35 = vector.broadcast %4 : vector<1x64xf32> to vector<16x64xf32>
    %36 = arith.addf %34, %35 : vector<16x64xf32>
    %cst_23 = arith.constant dense<0.000000e+00> : vector<16x64xf32>
    %37 = tpu.matmul %36, %0, %cst_23 {dimension_numbers = #tpu.dot_dimension_numbers<[1], [0], [0], [1], [0, 0, 1, 1], [], []>} : vector<16x64xf32>, vector<64x64xf32>, vector<16x64xf32> -> vector<16x64xf32>
    %38 = arith.mulf %36, %36 : vector<16x64xf32>
    %cst_24 = arith.constant dense<0.000000e+00> : vector<16x64xf32>
    %39 = tpu.matmul %38, %0, %cst_24 {dimension_numbers = #tpu.dot_dimension_numbers<[1], [0], [0], [1], [0, 0, 1, 1], [], []>} : vector<16x64xf32>, vector<64x64xf32>, vector<16x64xf32> -> vector<16x64xf32>
    %cst_25 = arith.constant dense<0.000000e+00> : vector<64xf32>
    %40 = vector.multi_reduction <add>, %37, %cst_25 [0] : vector<16x64xf32> to vector<64xf32>
    %41 = vector.shape_cast %40 : vector<64xf32> to vector<1x64xf32>
    %cst_26 = arith.constant dense<0.000000e+00> : vector<64xf32>
    %42 = vector.multi_reduction <add>, %39, %cst_26 [0] : vector<16x64xf32> to vector<64xf32>
    %43 = vector.shape_cast %42 : vector<64xf32> to vector<1x64xf32>
    %44 = arith.mulf %41, %41 : vector<1x64xf32>
    %45 = arith.subf %43, %44 : vector<1x64xf32>
    %cst_27 = arith.constant 0.000000e+00 : f32
    %46 = vector.broadcast %cst_27 : f32 to vector<1x64xf32>
    %47 = arith.maximumf %45, %46 : vector<1x64xf32>
    %cst_28 = arith.constant 9.99999974E-6 : f32
    %48 = vector.broadcast %cst_28 : f32 to vector<1x64xf32>
    %49 = arith.addf %47, %48 : vector<1x64xf32>
    %50 = math.rsqrt %49 : vector<1x64xf32>
    %51 = arith.mulf %50, %5 : vector<1x64xf32>
    %52 = arith.mulf %41, %51 : vector<1x64xf32>
    %53 = arith.subf %6, %52 : vector<1x64xf32>
    %54 = vector.broadcast %51 : vector<1x64xf32> to vector<16x64xf32>
    %55 = arith.mulf %36, %54 : vector<16x64xf32>
    %56 = vector.broadcast %53 : vector<1x64xf32> to vector<16x64xf32>
    %57 = arith.addf %55, %56 : vector<16x64xf32>
    %58 = arith.negf %57 : vector<16x64xf32>
    %59 = math.exp %58 : vector<16x64xf32>
    %cst_29 = arith.constant 1.000000e+00 : f32
    %60 = vector.broadcast %cst_29 : f32 to vector<16x64xf32>
    %61 = arith.addf %60, %59 : vector<16x64xf32>
    %62 = arith.divf %60, %61 : vector<16x64xf32>
    %63 = arith.mulf %57, %62 : vector<16x64xf32>
    %c3 = arith.constant 3 : index
    %c0_30 = arith.constant 0 : index
    %64 = vector.load %arg5[%c3, %c0_30] : memref<20x64xf32, #tpu.memory_space<vmem>>, vector<1x64xf32>
    %c0_31 = arith.constant 0 : index
    %c0_32 = arith.constant 0 : index
    %65 = vector.load %arg3[%c0_31, %c0_32] : memref<32x64xbf16, #tpu.memory_space<vmem>>, vector<32x64xbf16>
    %cst_33 = arith.constant dense<0.000000e+00> : vector<16x64xf32>
    %66 = tpu.matmul %7, %65, %cst_33 {dimension_numbers = #tpu.dot_dimension_numbers<[1], [0], [0], [1], [0, 0, 1, 1], [], []>} : vector<16x32xbf16>, vector<32x64xbf16>, vector<16x64xf32> -> vector<16x64xf32>
    %67 = vector.broadcast %64 : vector<1x64xf32> to vector<16x64xf32>
    %68 = arith.addf %66, %67 : vector<16x64xf32>
    %69 = arith.addf %63, %68 : vector<16x64xf32>
    %c4 = arith.constant 4 : index
    %c0_34 = arith.constant 0 : index
    %70 = vector.load %arg5[%c4, %c0_34] : memref<20x64xf32, #tpu.memory_space<vmem>>, vector<1x64xf32>
    %c5 = arith.constant 5 : index
    %c0_35 = arith.constant 0 : index
    %71 = vector.load %arg5[%c5, %c0_35] : memref<20x64xf32, #tpu.memory_space<vmem>>, vector<1x64xf32>
    %c6 = arith.constant 6 : index
    %c0_36 = arith.constant 0 : index
    %72 = vector.load %arg5[%c6, %c0_36] : memref<20x64xf32, #tpu.memory_space<vmem>>, vector<1x64xf32>
    %73 = arith.truncf %69 : vector<16x64xf32> to vector<16x64xbf16>
    %c2_i32 = arith.constant 2 : i32
    %74 = tpu.dynamic_rotate %69 by %c2_i32 dim 0 : vector<16x64xf32>, i32 -> vector<16x64xf32>
    %c2_i32_37 = arith.constant 2 : i32
    %75 = vector.broadcast %c2_i32_37 : i32 to vector<16x1xi32>
    %76 = arith.cmpi sge, %1, %75 : vector<16x1xi32>
    %cst_38 = arith.constant 0.000000e+00 : f32
    %77 = vector.shape_cast %76 : vector<16x1xi1> to vector<16x1xi1>
    %78 = vector.broadcast %77 : vector<16x1xi1> to vector<16x64xi1>
    %79 = vector.broadcast %cst_38 : f32 to vector<16x64xf32>
    %80 = arith.select %78, %74, %79 : vector<16x64xi1>, vector<16x64xf32>
    %81 = arith.truncf %80 : vector<16x64xf32> to vector<16x64xbf16>
    %c0_39 = arith.constant 0 : index
    %c0_40 = arith.constant 0 : index
    %c0_41 = arith.constant 0 : index
    %c0_42 = arith.constant 0 : index
    %82 = vector.load %arg4[%c0_39, %c0_40, %c0_41, %c0_42] : memref<4x3x64x64xbf16, #tpu.memory_space<vmem>>, vector<1x1x64x64xbf16>
    %83 = vector.shape_cast %82 : vector<1x1x64x64xbf16> to vector<64x64xbf16>
    %cst_43 = arith.constant dense<0.000000e+00> : vector<16x64xf32>
    %84 = tpu.matmul %81, %83, %cst_43 {dimension_numbers = #tpu.dot_dimension_numbers<[1], [0], [0], [1], [0, 0, 1, 1], [], []>} : vector<16x64xbf16>, vector<64x64xbf16>, vector<16x64xf32> -> vector<16x64xf32>
    %c0_44 = arith.constant 0 : index
    %c1_45 = arith.constant 1 : index
    %c0_46 = arith.constant 0 : index
    %c0_47 = arith.constant 0 : index
    %85 = vector.load %arg4[%c0_44, %c1_45, %c0_46, %c0_47] : memref<4x3x64x64xbf16, #tpu.memory_space<vmem>>, vector<1x1x64x64xbf16>
    %86 = vector.shape_cast %85 : vector<1x1x64x64xbf16> to vector<64x64xbf16>
    %cst_48 = arith.constant dense<0.000000e+00> : vector<16x64xf32>
    %87 = tpu.matmul %73, %86, %cst_48 {dimension_numbers = #tpu.dot_dimension_numbers<[1], [0], [0], [1], [0, 0, 1, 1], [], []>} : vector<16x64xbf16>, vector<64x64xbf16>, vector<16x64xf32> -> vector<16x64xf32>
    %88 = arith.addf %84, %87 : vector<16x64xf32>
    %c14_i32 = arith.constant 14 : i32
    %89 = tpu.dynamic_rotate %69 by %c14_i32 dim 0 : vector<16x64xf32>, i32 -> vector<16x64xf32>
    %c14_i32_49 = arith.constant 14 : i32
    %90 = vector.broadcast %c14_i32_49 : i32 to vector<16x1xi32>
    %91 = arith.cmpi slt, %1, %90 : vector<16x1xi32>
    %cst_50 = arith.constant 0.000000e+00 : f32
    %92 = vector.shape_cast %91 : vector<16x1xi1> to vector<16x1xi1>
    %93 = vector.broadcast %92 : vector<16x1xi1> to vector<16x64xi1>
    %94 = vector.broadcast %cst_50 : f32 to vector<16x64xf32>
    %95 = arith.select %93, %89, %94 : vector<16x64xi1>, vector<16x64xf32>
    %96 = arith.truncf %95 : vector<16x64xf32> to vector<16x64xbf16>
    %c0_51 = arith.constant 0 : index
    %c2_52 = arith.constant 2 : index
    %c0_53 = arith.constant 0 : index
    %c0_54 = arith.constant 0 : index
    %97 = vector.load %arg4[%c0_51, %c2_52, %c0_53, %c0_54] : memref<4x3x64x64xbf16, #tpu.memory_space<vmem>>, vector<1x1x64x64xbf16>
    %98 = vector.shape_cast %97 : vector<1x1x64x64xbf16> to vector<64x64xbf16>
    %cst_55 = arith.constant dense<0.000000e+00> : vector<16x64xf32>
    %99 = tpu.matmul %96, %98, %cst_55 {dimension_numbers = #tpu.dot_dimension_numbers<[1], [0], [0], [1], [0, 0, 1, 1], [], []>} : vector<16x64xbf16>, vector<64x64xbf16>, vector<16x64xf32> -> vector<16x64xf32>
    %100 = arith.addf %88, %99 : vector<16x64xf32>
    %101 = vector.broadcast %70 : vector<1x64xf32> to vector<16x64xf32>
    %102 = arith.addf %100, %101 : vector<16x64xf32>
    %cst_56 = arith.constant dense<0.000000e+00> : vector<16x64xf32>
    %103 = tpu.matmul %102, %0, %cst_56 {dimension_numbers = #tpu.dot_dimension_numbers<[1], [0], [0], [1], [0, 0, 1, 1], [], []>} : vector<16x64xf32>, vector<64x64xf32>, vector<16x64xf32> -> vector<16x64xf32>
    %104 = arith.mulf %102, %102 : vector<16x64xf32>
    %cst_57 = arith.constant dense<0.000000e+00> : vector<16x64xf32>
    %105 = tpu.matmul %104, %0, %cst_57 {dimension_numbers = #tpu.dot_dimension_numbers<[1], [0], [0], [1], [0, 0, 1, 1], [], []>} : vector<16x64xf32>, vector<64x64xf32>, vector<16x64xf32> -> vector<16x64xf32>
    %cst_58 = arith.constant dense<0.000000e+00> : vector<64xf32>
    %106 = vector.multi_reduction <add>, %103, %cst_58 [0] : vector<16x64xf32> to vector<64xf32>
    %107 = vector.shape_cast %106 : vector<64xf32> to vector<1x64xf32>
    %cst_59 = arith.constant dense<0.000000e+00> : vector<64xf32>
    %108 = vector.multi_reduction <add>, %105, %cst_59 [0] : vector<16x64xf32> to vector<64xf32>
    %109 = vector.shape_cast %108 : vector<64xf32> to vector<1x64xf32>
    %110 = arith.mulf %107, %107 : vector<1x64xf32>
    %111 = arith.subf %109, %110 : vector<1x64xf32>
    %cst_60 = arith.constant 0.000000e+00 : f32
    %112 = vector.broadcast %cst_60 : f32 to vector<1x64xf32>
    %113 = arith.maximumf %111, %112 : vector<1x64xf32>
    %cst_61 = arith.constant 9.99999974E-6 : f32
    %114 = vector.broadcast %cst_61 : f32 to vector<1x64xf32>
    %115 = arith.addf %113, %114 : vector<1x64xf32>
    %116 = math.rsqrt %115 : vector<1x64xf32>
    %117 = arith.mulf %116, %71 : vector<1x64xf32>
    %118 = arith.mulf %107, %117 : vector<1x64xf32>
    %119 = arith.subf %72, %118 : vector<1x64xf32>
    %120 = vector.broadcast %117 : vector<1x64xf32> to vector<16x64xf32>
    %121 = arith.mulf %102, %120 : vector<16x64xf32>
    %122 = vector.broadcast %119 : vector<1x64xf32> to vector<16x64xf32>
    %123 = arith.addf %121, %122 : vector<16x64xf32>
    %124 = arith.negf %123 : vector<16x64xf32>
    %125 = math.exp %124 : vector<16x64xf32>
    %cst_62 = arith.constant 1.000000e+00 : f32
    %126 = vector.broadcast %cst_62 : f32 to vector<16x64xf32>
    %127 = arith.addf %126, %125 : vector<16x64xf32>
    %128 = arith.divf %126, %127 : vector<16x64xf32>
    %129 = arith.mulf %123, %128 : vector<16x64xf32>
    %130 = arith.addf %129, %69 : vector<16x64xf32>
    %c8 = arith.constant 8 : index
    %c0_63 = arith.constant 0 : index
    %131 = vector.load %arg5[%c8, %c0_63] : memref<20x64xf32, #tpu.memory_space<vmem>>, vector<1x64xf32>
    %c9 = arith.constant 9 : index
    %c0_64 = arith.constant 0 : index
    %132 = vector.load %arg5[%c9, %c0_64] : memref<20x64xf32, #tpu.memory_space<vmem>>, vector<1x64xf32>
    %c10 = arith.constant 10 : index
    %c0_65 = arith.constant 0 : index
    %133 = vector.load %arg5[%c10, %c0_65] : memref<20x64xf32, #tpu.memory_space<vmem>>, vector<1x64xf32>
    %134 = arith.truncf %130 : vector<16x64xf32> to vector<16x64xbf16>
    %c4_i32 = arith.constant 4 : i32
    %135 = tpu.dynamic_rotate %130 by %c4_i32 dim 0 : vector<16x64xf32>, i32 -> vector<16x64xf32>
    %c4_i32_66 = arith.constant 4 : i32
    %136 = vector.broadcast %c4_i32_66 : i32 to vector<16x1xi32>
    %137 = arith.cmpi sge, %1, %136 : vector<16x1xi32>
    %cst_67 = arith.constant 0.000000e+00 : f32
    %138 = vector.shape_cast %137 : vector<16x1xi1> to vector<16x1xi1>
    %139 = vector.broadcast %138 : vector<16x1xi1> to vector<16x64xi1>
    %140 = vector.broadcast %cst_67 : f32 to vector<16x64xf32>
    %141 = arith.select %139, %135, %140 : vector<16x64xi1>, vector<16x64xf32>
    %142 = arith.truncf %141 : vector<16x64xf32> to vector<16x64xbf16>
    %c1_68 = arith.constant 1 : index
    %c0_69 = arith.constant 0 : index
    %c0_70 = arith.constant 0 : index
    %c0_71 = arith.constant 0 : index
    %143 = vector.load %arg4[%c1_68, %c0_69, %c0_70, %c0_71] : memref<4x3x64x64xbf16, #tpu.memory_space<vmem>>, vector<1x1x64x64xbf16>
    %144 = vector.shape_cast %143 : vector<1x1x64x64xbf16> to vector<64x64xbf16>
    %cst_72 = arith.constant dense<0.000000e+00> : vector<16x64xf32>
    %145 = tpu.matmul %142, %144, %cst_72 {dimension_numbers = #tpu.dot_dimension_numbers<[1], [0], [0], [1], [0, 0, 1, 1], [], []>} : vector<16x64xbf16>, vector<64x64xbf16>, vector<16x64xf32> -> vector<16x64xf32>
    %c1_73 = arith.constant 1 : index
    %c1_74 = arith.constant 1 : index
    %c0_75 = arith.constant 0 : index
    %c0_76 = arith.constant 0 : index
    %146 = vector.load %arg4[%c1_73, %c1_74, %c0_75, %c0_76] : memref<4x3x64x64xbf16, #tpu.memory_space<vmem>>, vector<1x1x64x64xbf16>
    %147 = vector.shape_cast %146 : vector<1x1x64x64xbf16> to vector<64x64xbf16>
    %cst_77 = arith.constant dense<0.000000e+00> : vector<16x64xf32>
    %148 = tpu.matmul %134, %147, %cst_77 {dimension_numbers = #tpu.dot_dimension_numbers<[1], [0], [0], [1], [0, 0, 1, 1], [], []>} : vector<16x64xbf16>, vector<64x64xbf16>, vector<16x64xf32> -> vector<16x64xf32>
    %149 = arith.addf %145, %148 : vector<16x64xf32>
    %c12_i32 = arith.constant 12 : i32
    %150 = tpu.dynamic_rotate %130 by %c12_i32 dim 0 : vector<16x64xf32>, i32 -> vector<16x64xf32>
    %c12_i32_78 = arith.constant 12 : i32
    %151 = vector.broadcast %c12_i32_78 : i32 to vector<16x1xi32>
    %152 = arith.cmpi slt, %1, %151 : vector<16x1xi32>
    %cst_79 = arith.constant 0.000000e+00 : f32
    %153 = vector.shape_cast %152 : vector<16x1xi1> to vector<16x1xi1>
    %154 = vector.broadcast %153 : vector<16x1xi1> to vector<16x64xi1>
    %155 = vector.broadcast %cst_79 : f32 to vector<16x64xf32>
    %156 = arith.select %154, %150, %155 : vector<16x64xi1>, vector<16x64xf32>
    %157 = arith.truncf %156 : vector<16x64xf32> to vector<16x64xbf16>
    %c1_80 = arith.constant 1 : index
    %c2_81 = arith.constant 2 : index
    %c0_82 = arith.constant 0 : index
    %c0_83 = arith.constant 0 : index
    %158 = vector.load %arg4[%c1_80, %c2_81, %c0_82, %c0_83] : memref<4x3x64x64xbf16, #tpu.memory_space<vmem>>, vector<1x1x64x64xbf16>
    %159 = vector.shape_cast %158 : vector<1x1x64x64xbf16> to vector<64x64xbf16>
    %cst_84 = arith.constant dense<0.000000e+00> : vector<16x64xf32>
    %160 = tpu.matmul %157, %159, %cst_84 {dimension_numbers = #tpu.dot_dimension_numbers<[1], [0], [0], [1], [0, 0, 1, 1], [], []>} : vector<16x64xbf16>, vector<64x64xbf16>, vector<16x64xf32> -> vector<16x64xf32>
    %161 = arith.addf %149, %160 : vector<16x64xf32>
    %162 = vector.broadcast %131 : vector<1x64xf32> to vector<16x64xf32>
    %163 = arith.addf %161, %162 : vector<16x64xf32>
    %cst_85 = arith.constant dense<0.000000e+00> : vector<16x64xf32>
    %164 = tpu.matmul %163, %0, %cst_85 {dimension_numbers = #tpu.dot_dimension_numbers<[1], [0], [0], [1], [0, 0, 1, 1], [], []>} : vector<16x64xf32>, vector<64x64xf32>, vector<16x64xf32> -> vector<16x64xf32>
    %165 = arith.mulf %163, %163 : vector<16x64xf32>
    %cst_86 = arith.constant dense<0.000000e+00> : vector<16x64xf32>
    %166 = tpu.matmul %165, %0, %cst_86 {dimension_numbers = #tpu.dot_dimension_numbers<[1], [0], [0], [1], [0, 0, 1, 1], [], []>} : vector<16x64xf32>, vector<64x64xf32>, vector<16x64xf32> -> vector<16x64xf32>
    %cst_87 = arith.constant dense<0.000000e+00> : vector<64xf32>
    %167 = vector.multi_reduction <add>, %164, %cst_87 [0] : vector<16x64xf32> to vector<64xf32>
    %168 = vector.shape_cast %167 : vector<64xf32> to vector<1x64xf32>
    %cst_88 = arith.constant dense<0.000000e+00> : vector<64xf32>
    %169 = vector.multi_reduction <add>, %166, %cst_88 [0] : vector<16x64xf32> to vector<64xf32>
    %170 = vector.shape_cast %169 : vector<64xf32> to vector<1x64xf32>
    %171 = arith.mulf %168, %168 : vector<1x64xf32>
    %172 = arith.subf %170, %171 : vector<1x64xf32>
    %cst_89 = arith.constant 0.000000e+00 : f32
    %173 = vector.broadcast %cst_89 : f32 to vector<1x64xf32>
    %174 = arith.maximumf %172, %173 : vector<1x64xf32>
    %cst_90 = arith.constant 9.99999974E-6 : f32
    %175 = vector.broadcast %cst_90 : f32 to vector<1x64xf32>
    %176 = arith.addf %174, %175 : vector<1x64xf32>
    %177 = math.rsqrt %176 : vector<1x64xf32>
    %178 = arith.mulf %177, %132 : vector<1x64xf32>
    %179 = arith.mulf %168, %178 : vector<1x64xf32>
    %180 = arith.subf %133, %179 : vector<1x64xf32>
    %181 = vector.broadcast %178 : vector<1x64xf32> to vector<16x64xf32>
    %182 = arith.mulf %163, %181 : vector<16x64xf32>
    %183 = vector.broadcast %180 : vector<1x64xf32> to vector<16x64xf32>
    %184 = arith.addf %182, %183 : vector<16x64xf32>
    %185 = arith.negf %184 : vector<16x64xf32>
    %186 = math.exp %185 : vector<16x64xf32>
    %cst_91 = arith.constant 1.000000e+00 : f32
    %187 = vector.broadcast %cst_91 : f32 to vector<16x64xf32>
    %188 = arith.addf %187, %186 : vector<16x64xf32>
    %189 = arith.divf %187, %188 : vector<16x64xf32>
    %190 = arith.mulf %184, %189 : vector<16x64xf32>
    %191 = arith.addf %190, %130 : vector<16x64xf32>
    %c12 = arith.constant 12 : index
    %c0_92 = arith.constant 0 : index
    %192 = vector.load %arg5[%c12, %c0_92] : memref<20x64xf32, #tpu.memory_space<vmem>>, vector<1x64xf32>
    %c13 = arith.constant 13 : index
    %c0_93 = arith.constant 0 : index
    %193 = vector.load %arg5[%c13, %c0_93] : memref<20x64xf32, #tpu.memory_space<vmem>>, vector<1x64xf32>
    %c14 = arith.constant 14 : index
    %c0_94 = arith.constant 0 : index
    %194 = vector.load %arg5[%c14, %c0_94] : memref<20x64xf32, #tpu.memory_space<vmem>>, vector<1x64xf32>
    %195 = arith.truncf %191 : vector<16x64xf32> to vector<16x64xbf16>
    %c8_i32 = arith.constant 8 : i32
    %196 = tpu.dynamic_rotate %191 by %c8_i32 dim 0 : vector<16x64xf32>, i32 -> vector<16x64xf32>
    %c8_i32_95 = arith.constant 8 : i32
    %197 = vector.broadcast %c8_i32_95 : i32 to vector<16x1xi32>
    %198 = arith.cmpi sge, %1, %197 : vector<16x1xi32>
    %cst_96 = arith.constant 0.000000e+00 : f32
    %199 = vector.shape_cast %198 : vector<16x1xi1> to vector<16x1xi1>
    %200 = vector.broadcast %199 : vector<16x1xi1> to vector<16x64xi1>
    %201 = vector.broadcast %cst_96 : f32 to vector<16x64xf32>
    %202 = arith.select %200, %196, %201 : vector<16x64xi1>, vector<16x64xf32>
    %203 = arith.truncf %202 : vector<16x64xf32> to vector<16x64xbf16>
    %c2_97 = arith.constant 2 : index
    %c0_98 = arith.constant 0 : index
    %c0_99 = arith.constant 0 : index
    %c0_100 = arith.constant 0 : index
    %204 = vector.load %arg4[%c2_97, %c0_98, %c0_99, %c0_100] : memref<4x3x64x64xbf16, #tpu.memory_space<vmem>>, vector<1x1x64x64xbf16>
    %205 = vector.shape_cast %204 : vector<1x1x64x64xbf16> to vector<64x64xbf16>
    %cst_101 = arith.constant dense<0.000000e+00> : vector<16x64xf32>
    %206 = tpu.matmul %203, %205, %cst_101 {dimension_numbers = #tpu.dot_dimension_numbers<[1], [0], [0], [1], [0, 0, 1, 1], [], []>} : vector<16x64xbf16>, vector<64x64xbf16>, vector<16x64xf32> -> vector<16x64xf32>
    %c2_102 = arith.constant 2 : index
    %c1_103 = arith.constant 1 : index
    %c0_104 = arith.constant 0 : index
    %c0_105 = arith.constant 0 : index
    %207 = vector.load %arg4[%c2_102, %c1_103, %c0_104, %c0_105] : memref<4x3x64x64xbf16, #tpu.memory_space<vmem>>, vector<1x1x64x64xbf16>
    %208 = vector.shape_cast %207 : vector<1x1x64x64xbf16> to vector<64x64xbf16>
    %cst_106 = arith.constant dense<0.000000e+00> : vector<16x64xf32>
    %209 = tpu.matmul %195, %208, %cst_106 {dimension_numbers = #tpu.dot_dimension_numbers<[1], [0], [0], [1], [0, 0, 1, 1], [], []>} : vector<16x64xbf16>, vector<64x64xbf16>, vector<16x64xf32> -> vector<16x64xf32>
    %210 = arith.addf %206, %209 : vector<16x64xf32>
    %c8_i32_107 = arith.constant 8 : i32
    %211 = tpu.dynamic_rotate %191 by %c8_i32_107 dim 0 : vector<16x64xf32>, i32 -> vector<16x64xf32>
    %c8_i32_108 = arith.constant 8 : i32
    %212 = vector.broadcast %c8_i32_108 : i32 to vector<16x1xi32>
    %213 = arith.cmpi slt, %1, %212 : vector<16x1xi32>
    %cst_109 = arith.constant 0.000000e+00 : f32
    %214 = vector.shape_cast %213 : vector<16x1xi1> to vector<16x1xi1>
    %215 = vector.broadcast %214 : vector<16x1xi1> to vector<16x64xi1>
    %216 = vector.broadcast %cst_109 : f32 to vector<16x64xf32>
    %217 = arith.select %215, %211, %216 : vector<16x64xi1>, vector<16x64xf32>
    %218 = arith.truncf %217 : vector<16x64xf32> to vector<16x64xbf16>
    %c2_110 = arith.constant 2 : index
    %c2_111 = arith.constant 2 : index
    %c0_112 = arith.constant 0 : index
    %c0_113 = arith.constant 0 : index
    %219 = vector.load %arg4[%c2_110, %c2_111, %c0_112, %c0_113] : memref<4x3x64x64xbf16, #tpu.memory_space<vmem>>, vector<1x1x64x64xbf16>
    %220 = vector.shape_cast %219 : vector<1x1x64x64xbf16> to vector<64x64xbf16>
    %cst_114 = arith.constant dense<0.000000e+00> : vector<16x64xf32>
    %221 = tpu.matmul %218, %220, %cst_114 {dimension_numbers = #tpu.dot_dimension_numbers<[1], [0], [0], [1], [0, 0, 1, 1], [], []>} : vector<16x64xbf16>, vector<64x64xbf16>, vector<16x64xf32> -> vector<16x64xf32>
    %222 = arith.addf %210, %221 : vector<16x64xf32>
    %223 = vector.broadcast %192 : vector<1x64xf32> to vector<16x64xf32>
    %224 = arith.addf %222, %223 : vector<16x64xf32>
    %cst_115 = arith.constant dense<0.000000e+00> : vector<16x64xf32>
    %225 = tpu.matmul %224, %0, %cst_115 {dimension_numbers = #tpu.dot_dimension_numbers<[1], [0], [0], [1], [0, 0, 1, 1], [], []>} : vector<16x64xf32>, vector<64x64xf32>, vector<16x64xf32> -> vector<16x64xf32>
    %226 = arith.mulf %224, %224 : vector<16x64xf32>
    %cst_116 = arith.constant dense<0.000000e+00> : vector<16x64xf32>
    %227 = tpu.matmul %226, %0, %cst_116 {dimension_numbers = #tpu.dot_dimension_numbers<[1], [0], [0], [1], [0, 0, 1, 1], [], []>} : vector<16x64xf32>, vector<64x64xf32>, vector<16x64xf32> -> vector<16x64xf32>
    %cst_117 = arith.constant dense<0.000000e+00> : vector<64xf32>
    %228 = vector.multi_reduction <add>, %225, %cst_117 [0] : vector<16x64xf32> to vector<64xf32>
    %229 = vector.shape_cast %228 : vector<64xf32> to vector<1x64xf32>
    %cst_118 = arith.constant dense<0.000000e+00> : vector<64xf32>
    %230 = vector.multi_reduction <add>, %227, %cst_118 [0] : vector<16x64xf32> to vector<64xf32>
    %231 = vector.shape_cast %230 : vector<64xf32> to vector<1x64xf32>
    %232 = arith.mulf %229, %229 : vector<1x64xf32>
    %233 = arith.subf %231, %232 : vector<1x64xf32>
    %cst_119 = arith.constant 0.000000e+00 : f32
    %234 = vector.broadcast %cst_119 : f32 to vector<1x64xf32>
    %235 = arith.maximumf %233, %234 : vector<1x64xf32>
    %cst_120 = arith.constant 9.99999974E-6 : f32
    %236 = vector.broadcast %cst_120 : f32 to vector<1x64xf32>
    %237 = arith.addf %235, %236 : vector<1x64xf32>
    %238 = math.rsqrt %237 : vector<1x64xf32>
    %239 = arith.mulf %238, %193 : vector<1x64xf32>
    %240 = arith.mulf %229, %239 : vector<1x64xf32>
    %241 = arith.subf %194, %240 : vector<1x64xf32>
    %242 = vector.broadcast %239 : vector<1x64xf32> to vector<16x64xf32>
    %243 = arith.mulf %224, %242 : vector<16x64xf32>
    %244 = vector.broadcast %241 : vector<1x64xf32> to vector<16x64xf32>
    %245 = arith.addf %243, %244 : vector<16x64xf32>
    %246 = arith.negf %245 : vector<16x64xf32>
    %247 = math.exp %246 : vector<16x64xf32>
    %cst_121 = arith.constant 1.000000e+00 : f32
    %248 = vector.broadcast %cst_121 : f32 to vector<16x64xf32>
    %249 = arith.addf %248, %247 : vector<16x64xf32>
    %250 = arith.divf %248, %249 : vector<16x64xf32>
    %251 = arith.mulf %245, %250 : vector<16x64xf32>
    %252 = arith.addf %251, %191 : vector<16x64xf32>
    %c16 = arith.constant 16 : index
    %c0_122 = arith.constant 0 : index
    %253 = vector.load %arg5[%c16, %c0_122] : memref<20x64xf32, #tpu.memory_space<vmem>>, vector<1x64xf32>
    %c17 = arith.constant 17 : index
    %c0_123 = arith.constant 0 : index
    %254 = vector.load %arg5[%c17, %c0_123] : memref<20x64xf32, #tpu.memory_space<vmem>>, vector<1x64xf32>
    %c18 = arith.constant 18 : index
    %c0_124 = arith.constant 0 : index
    %255 = vector.load %arg5[%c18, %c0_124] : memref<20x64xf32, #tpu.memory_space<vmem>>, vector<1x64xf32>
    %256 = arith.truncf %252 : vector<16x64xf32> to vector<16x64xbf16>
    %c3_125 = arith.constant 3 : index
    %c1_126 = arith.constant 1 : index
    %c0_127 = arith.constant 0 : index
    %c0_128 = arith.constant 0 : index
    %257 = vector.load %arg4[%c3_125, %c1_126, %c0_127, %c0_128] : memref<4x3x64x64xbf16, #tpu.memory_space<vmem>>, vector<1x1x64x64xbf16>
    %258 = vector.shape_cast %257 : vector<1x1x64x64xbf16> to vector<64x64xbf16>
    %cst_129 = arith.constant dense<0.000000e+00> : vector<16x64xf32>
    %259 = tpu.matmul %256, %258, %cst_129 {dimension_numbers = #tpu.dot_dimension_numbers<[1], [0], [0], [1], [0, 0, 1, 1], [], []>} : vector<16x64xbf16>, vector<64x64xbf16>, vector<16x64xf32> -> vector<16x64xf32>
    %260 = vector.broadcast %253 : vector<1x64xf32> to vector<16x64xf32>
    %261 = arith.addf %259, %260 : vector<16x64xf32>
    %cst_130 = arith.constant dense<0.000000e+00> : vector<16x64xf32>
    %262 = tpu.matmul %261, %0, %cst_130 {dimension_numbers = #tpu.dot_dimension_numbers<[1], [0], [0], [1], [0, 0, 1, 1], [], []>} : vector<16x64xf32>, vector<64x64xf32>, vector<16x64xf32> -> vector<16x64xf32>
    %263 = arith.mulf %261, %261 : vector<16x64xf32>
    %cst_131 = arith.constant dense<0.000000e+00> : vector<16x64xf32>
    %264 = tpu.matmul %263, %0, %cst_131 {dimension_numbers = #tpu.dot_dimension_numbers<[1], [0], [0], [1], [0, 0, 1, 1], [], []>} : vector<16x64xf32>, vector<64x64xf32>, vector<16x64xf32> -> vector<16x64xf32>
    %cst_132 = arith.constant dense<0.000000e+00> : vector<64xf32>
    %265 = vector.multi_reduction <add>, %262, %cst_132 [0] : vector<16x64xf32> to vector<64xf32>
    %266 = vector.shape_cast %265 : vector<64xf32> to vector<1x64xf32>
    %cst_133 = arith.constant dense<0.000000e+00> : vector<64xf32>
    %267 = vector.multi_reduction <add>, %264, %cst_133 [0] : vector<16x64xf32> to vector<64xf32>
    %268 = vector.shape_cast %267 : vector<64xf32> to vector<1x64xf32>
    %269 = arith.mulf %266, %266 : vector<1x64xf32>
    %270 = arith.subf %268, %269 : vector<1x64xf32>
    %cst_134 = arith.constant 0.000000e+00 : f32
    %271 = vector.broadcast %cst_134 : f32 to vector<1x64xf32>
    %272 = arith.maximumf %270, %271 : vector<1x64xf32>
    %cst_135 = arith.constant 9.99999974E-6 : f32
    %273 = vector.broadcast %cst_135 : f32 to vector<1x64xf32>
    %274 = arith.addf %272, %273 : vector<1x64xf32>
    %275 = math.rsqrt %274 : vector<1x64xf32>
    %276 = arith.mulf %275, %254 : vector<1x64xf32>
    %277 = arith.mulf %266, %276 : vector<1x64xf32>
    %278 = arith.subf %255, %277 : vector<1x64xf32>
    %279 = vector.broadcast %276 : vector<1x64xf32> to vector<16x64xf32>
    %280 = arith.mulf %261, %279 : vector<16x64xf32>
    %281 = vector.broadcast %278 : vector<1x64xf32> to vector<16x64xf32>
    %282 = arith.addf %280, %281 : vector<16x64xf32>
    %283 = arith.negf %282 : vector<16x64xf32>
    %284 = math.exp %283 : vector<16x64xf32>
    %cst_136 = arith.constant 1.000000e+00 : f32
    %285 = vector.broadcast %cst_136 : f32 to vector<16x64xf32>
    %286 = arith.addf %285, %284 : vector<16x64xf32>
    %287 = arith.divf %285, %286 : vector<16x64xf32>
    %288 = arith.mulf %282, %287 : vector<16x64xf32>
    %289 = arith.addf %288, %252 : vector<16x64xf32>
    %c0_137 = arith.constant 0 : index
    %c0_138 = arith.constant 0 : index
    %c0_139 = arith.constant 0 : index
    %290 = vector.load %arg7[%c0_137, %c0_138, %c0_139] : memref<1x16x64xf32, #tpu.memory_space<vmem>>, vector<1x16x64xf32>
    %291 = vector.shape_cast %290 : vector<1x16x64xf32> to vector<16x64xf32>
    %292 = vector.shape_cast %289 : vector<16x64xf32> to vector<1x16x64xf32>
    tpu.vector_store %arg7[%c0_137, %c0_138, %c0_139], %292 {strides = array<i32>} : memref<1x16x64xf32, #tpu.memory_space<vmem>>, vector<1x16x64xf32>,
    return
  }
  func.func @transform_0(%arg0: i32) -> (i32, i32, i32) {
    %c0_i32 = arith.constant 0 : i32
    %c0_i32_0 = arith.constant 0 : i32
    %c0_i32_1 = arith.constant 0 : i32
    return %arg0, %c0_i32, %c0_i32_0 : i32, i32, i32
  }
  func.func @transform_1(%arg0: i32) -> (i32, i32, i32) {
    %c0_i32 = arith.constant 0 : i32
    %c0_i32_0 = arith.constant 0 : i32
    %c0_i32_1 = arith.constant 0 : i32
    %c0_i32_2 = arith.constant 0 : i32
    return %c0_i32, %c0_i32_0, %c0_i32_1 : i32, i32, i32
  }
  func.func @transform_2(%arg0: i32) -> (i32, i32) {
    %c0_i32 = arith.constant 0 : i32
    %c0_i32_0 = arith.constant 0 : i32
    %c0_i32_1 = arith.constant 0 : i32
    return %c0_i32, %c0_i32_0 : i32, i32
  }
  func.func @transform_3(%arg0: i32) -> (i32, i32, i32, i32) {
    %c0_i32 = arith.constant 0 : i32
    %c0_i32_0 = arith.constant 0 : i32
    %c0_i32_1 = arith.constant 0 : i32
    %c0_i32_2 = arith.constant 0 : i32
    %c0_i32_3 = arith.constant 0 : i32
    return %c0_i32, %c0_i32_0, %c0_i32_1, %c0_i32_2 : i32, i32, i32, i32
  }
  func.func @transform_4(%arg0: i32) -> (i32, i32) {
    %c0_i32 = arith.constant 0 : i32
    %c0_i32_0 = arith.constant 0 : i32
    %c0_i32_1 = arith.constant 0 : i32
    return %c0_i32, %c0_i32_0 : i32, i32
  }
  func.func @transform_5(%arg0: i32) -> (i32, i32) {
    %c0_i32 = arith.constant 0 : i32
    %c0_i32_0 = arith.constant 0 : i32
    %c0_i32_1 = arith.constant 0 : i32
    return %c0_i32, %c0_i32_0 : i32, i32
  }
  func.func @transform_6(%arg0: i32) -> (i32, i32, i32) {
    %c0_i32 = arith.constant 0 : i32
    %c0_i32_0 = arith.constant 0 : i32
    %c0_i32_1 = arith.constant 0 : i32
    return %arg0, %c0_i32, %c0_i32_0 : i32, i32, i32
  }
}

</mosaic_0001>

<llo_original>
// kernel: tpu_custom_call.1
$region0: #{tpu_custom_call.1}
  #allocation0 [shape = 'u32[]', space=smem, size = 0x4, offset = 0x4, fixed_abs, tag = 'smem constant byte address 0x4 - core index']
  #allocation1 [shape = 'u32[144,128]{1,0:T(1,128)}', space=vmem, size = 0x12000, scoped, tag = 'internal scratch']
  %s0 = inlined_call_operand.hbm [shape: f32[1,16,32], index: 0, kind: input, shape index: {}]
  %s1 = inlined_call_operand.hbm [shape: bf16[3,32,64], index: 1, kind: input, shape index: {}]
  %s2 = inlined_call_operand.hbm [shape: bf16[32,64], index: 2, kind: input, shape index: {}]
  %s3 = inlined_call_operand.hbm [shape: bf16[4,3,64,64], index: 3, kind: input, shape index: {}]
  %s4 = inlined_call_operand.hbm [shape: f32[20,64], index: 4, kind: input, shape index: {}]
  %s5 = inlined_call_operand.hbm [shape: f32[64,64], index: 5, kind: input, shape index: {}]
  %s6 = inlined_call_operand.hbm [shape: f32[1,16,64], index: 6, kind: output, shape index: {}]
  %s7 = sld [smem:[#allocation0]]
  $region58: #{tpu_custom_call.1} parent=0
    _
  %s9 = ssub.s32 1, %s7
  %s10 = scalar_select 0, %s9, %s7
  $region1: #{tpu_custom_call.1} parent=0
    #allocation2 [shape = 'u8[8192]{0}', space=vmem, size = 0x2000, scoped, tag = 'input window, operand 0, single buffered']
    #allocation3 [shape = 's32[1]{0}', space=sflag, size = 0x4, scoped, tag = 'scoped memory for tpu_custom_call.1']
    #allocation4 [shape = 's32[1]{0}', space=sflag, size = 0x4, scoped, tag = 'scoped memory for tpu_custom_call.1']
    #allocation5 [shape = 'u8[24576]{0}', space=vmem, size = 0x6000, scoped, tag = 'input window, operand 1, single buffered']
    #allocation6 [shape = 's32[1]{0}', space=sflag, size = 0x4, scoped, tag = 'scoped memory for tpu_custom_call.1']
    #allocation7 [shape = 'u8[8192]{0}', space=vmem, size = 0x2000, scoped, tag = 'input window, operand 2, single buffered']
    #allocation8 [shape = 'u8[196608]{0}', space=vmem, size = 0x30000, scoped, tag = 'input window, operand 3, single buffered']
    #allocation9 [shape = 's32[1]{0}', space=sflag, size = 0x4, scoped, tag = 'scoped memory for tpu_custom_call.1']
    #allocation10 [shape = 'u8[12288]{0}', space=vmem, size = 0x3000, scoped, tag = 'input window, operand 4, single buffered']
    #allocation11 [shape = 'u8[32768]{0}', space=vmem, size = 0x8000, scoped, tag = 'input window, operand 5, single buffered']
    #allocation12 [shape = 's32[1]{0}', space=sflag, size = 0x4, scoped, tag = 'scoped memory for tpu_custom_call.1']
    #allocation13 [shape = 'u8[8192]{0}', space=vmem, size = 0x2000, scoped, tag = 'output window, operand 0, single buffered']
    %11 = vsyncpa [#allocation3], 0
    %12 = vsyncpa [#allocation6], 0
    %13 = vsyncpa [#allocation9], 0
    %14 = vsyncpa [#allocation12], 0
    %15 = vsyncpa [#allocation4], 0
    // Predicated region
    $region2: #{tpu_custom_call.1} parent=1 // pred_check
      _
    $region3: #{tpu_custom_call.1} parent=1 // pred_check_branch
      %17 = sbr.rel (0) target = $region5
    $region4: #{tpu_custom_call.1} parent=1 // pred_region
      %s19 = ssub.s32 256, 256
      %20 = vsyncadd [#allocation3], %s19
      %s21 = sshll.u32 [#allocation2], 4
      %s22 = int_to_ptr.vmem [resolvable:$true] %s21
      %27 = dma.hbm_to_vmem [thread:$0]  %s0, 256, %s22, [#allocation3], 128, 128, 8
    $region5: #{tpu_custom_call.1} parent=1 // pred_fallthru
      _
    // Predicated region
    $region6: #{tpu_custom_call.1} parent=1 // pred_check
      _
    $region7: #{tpu_custom_call.1} parent=1 // pred_check_branch
      %29 = sbr.rel (0) target = $region9
    $region8: #{tpu_custom_call.1} parent=1 // pred_region
      %s31 = ssub.s32 768, 768
      %32 = vsyncadd [#allocation6], %s31
      %s33 = sshll.u32 [#allocation5], 4
      %s34 = int_to_ptr.vmem [resolvable:$true] %s33
      %39 = dma.hbm_to_vmem [thread:$0]  %s1, 768, %s34, [#allocation6], 64, 64, 4
    $region9: #{tpu_custom_call.1} parent=1 // pred_fallthru
      _
    // Predicated region
    $region10: #{tpu_custom_call.1} parent=1 // pred_check
      _
    $region11: #{tpu_custom_call.1} parent=1 // pred_check_branch
      %41 = sbr.rel (0) target = $region13
    $region12: #{tpu_custom_call.1} parent=1 // pred_region
      %s43 = ssub.s32 256, 256
      %44 = vsyncadd [#allocation6], %s43
      %s45 = sshll.u32 [#allocation7], 4
      %s46 = int_to_ptr.vmem [resolvable:$true] %s45
      %51 = dma.hbm_to_vmem [thread:$0]  %s2, 256, %s46, [#allocation6], 64, 64, 4
    $region13: #{tpu_custom_call.1} parent=1 // pred_fallthru
      _
    // Predicated region
    $region14: #{tpu_custom_call.1} parent=1 // pred_check
      _
    $region15: #{tpu_custom_call.1} parent=1 // pred_check_branch
      %53 = sbr.rel (0) target = $region17
    $region16: #{tpu_custom_call.1} parent=1 // pred_region
      %s55 = ssub.s32 6144, 6144
      %56 = vsyncadd [#allocation9], %s55
      %s57 = sshll.u32 [#allocation8], 4
      %s58 = int_to_ptr.vmem [resolvable:$true] %s57
      %63 = dma.hbm_to_vmem [thread:$0]  %s3, 6144, %s58, [#allocation9], 64, 64, 4
    $region17: #{tpu_custom_call.1} parent=1 // pred_fallthru
      _
    // Predicated region
    $region18: #{tpu_custom_call.1} parent=1 // pred_check
      _
    $region19: #{tpu_custom_call.1} parent=1 // pred_check_branch
      %65 = sbr.rel (0) target = $region21
    $region20: #{tpu_custom_call.1} parent=1 // pred_region
      %s67 = ssub.s32 384, 384
      %68 = vsyncadd [#allocation9], %s67
      %s69 = sshll.u32 [#allocation10], 4
      %s70 = int_to_ptr.vmem [resolvable:$true] %s69
      %75 = dma.hbm_to_vmem [thread:$0]  %s4, 384, %s70, [#allocation9], 128, 128, 8
    $region21: #{tpu_custom_call.1} parent=1 // pred_fallthru
      _
    // Predicated region
    $region22: #{tpu_custom_call.1} parent=1 // pred_check
      _
    $region23: #{tpu_custom_call.1} parent=1 // pred_check_branch
      %77 = sbr.rel (0) target = $region25
    $region24: #{tpu_custom_call.1} parent=1 // pred_region
      %s79 = ssub.s32 1024, 1024
      %80 = vsyncadd [#allocation12], %s79
      %s81 = sshll.u32 [#allocation11], 4
      %s82 = int_to_ptr.vmem [resolvable:$true] %s81
      %87 = dma.hbm_to_vmem [thread:$0]  %s5, 1024, %s82, [#allocation12], 128, 128, 8
    $region25: #{tpu_custom_call.1} parent=1 // pred_fallthru
      _
    // Predicated region
    $region26: #{tpu_custom_call.1} parent=1 // pred_check
      _
    $region27: #{tpu_custom_call.1} parent=1 // pred_check_branch
      %89 = sbr.rel (0) target = $region29
    $region28: #{tpu_custom_call.1} parent=1 // pred_region
      %90 = dma.done [#allocation3], 256
    $region29: #{tpu_custom_call.1} parent=1 // pred_fallthru
      _
    // Predicated region
    $region30: #{tpu_custom_call.1} parent=1 // pred_check
      _
    $region31: #{tpu_custom_call.1} parent=1 // pred_check_branch
      %92 = sbr.rel (0) target = $region33
    $region32: #{tpu_custom_call.1} parent=1 // pred_region
      %93 = dma.done [#allocation6], 768
    $region33: #{tpu_custom_call.1} parent=1 // pred_fallthru
      _
    // Predicated region
    $region34: #{tpu_custom_call.1} parent=1 // pred_check
      _
    $region35: #{tpu_custom_call.1} parent=1 // pred_check_branch
      %95 = sbr.rel (0) target = $region37
    $region36: #{tpu_custom_call.1} parent=1 // pred_region
      %96 = dma.done [#allocation6], 256
    $region37: #{tpu_custom_call.1} parent=1 // pred_fallthru
      _
    // Predicated region
    $region38: #{tpu_custom_call.1} parent=1 // pred_check
      _
    $region39: #{tpu_custom_call.1} parent=1 // pred_check_branch
      %98 = sbr.rel (0) target = $region41
    $region40: #{tpu_custom_call.1} parent=1 // pred_region
      %99 = dma.done [#allocation9], 6144
    $region41: #{tpu_custom_call.1} parent=1 // pred_fallthru
      _
    // Predicated region
    $region42: #{tpu_custom_call.1} parent=1 // pred_check
      _
    $region43: #{tpu_custom_call.1} parent=1 // pred_check_branch
      %101 = sbr.rel (0) target = $region45
    $region44: #{tpu_custom_call.1} parent=1 // pred_region
      %102 = dma.done [#allocation9], 384
    $region45: #{tpu_custom_call.1} parent=1 // pred_fallthru
      _
    // Predicated region
    $region46: #{tpu_custom_call.1} parent=1 // pred_check
      _
    $region47: #{tpu_custom_call.1} parent=1 // pred_check_branch
      %104 = sbr.rel (0) target = $region49
    $region48: #{tpu_custom_call.1} parent=1 // pred_region
      %105 = dma.done [#allocation12], 1024
    $region49: #{tpu_custom_call.1} parent=1 // pred_fallthru
      _
    %v107 = vld [vmem:[#allocation11] sm:$0xff]
    %v108 = vld [vmem:[#allocation11 + $0x8] sm:$0xff]
    %v109 = vld [vmem:[#allocation11 + $0x10] sm:$0xff]
    %v110 = vld [vmem:[#allocation11 + $0x18] sm:$0xff]
    %v111 = vld [vmem:[#allocation11 + $0x20] sm:$0xff]
    %v112 = vld [vmem:[#allocation11 + $0x28] sm:$0xff]
    %v113 = vld [vmem:[#allocation11 + $0x30] sm:$0xff]
    %v114 = vld [vmem:[#allocation11 + $0x38] sm:$0xff]
    %v115 = vlaneseq
    %v116 = vshrl.u32 %v115, 7
    %v117 = vadd.s32 %v116, 8
    %v118 = vld [vmem:[#allocation2] sm:$0xff]
    %v119 = vld [vmem:[#allocation2 + $0x8] sm:$0xff]
    %v120 = vld [vmem:[#allocation10] sm:$0x1]
    %v121 = vld [vmem:[#allocation10 + $0x1] sm:$0x1]
    %v122 = vld [vmem:[#allocation10 + $0x2] sm:$0x1]
    %v123 = vpack.c.bf16 %v119, %v118
    %v124 = vrot.slane %v118, 7
    %v125 = vrot.slane %v119, 7
    %vm126 = vcmp.lt.s32.totalorder %v116, 1
    %v127 = vsel %vm126, %v124, %v125
    %v128 = vsel %vm126, %v125, %v124
    %vm129 = vcmp.ge.s32.totalorder %v116, 1
    %vm130 = vcmp.ge.s32.totalorder %v117, 1
    %v131 = vsel %vm129, 1, 0
    %v132 = vsel %vm130, 1, 0
    %vm133 = vcmp.eq.s32.totalorder %v131, 1
    %vm134 = vcmp.eq.s32.totalorder %v132, 1
    %v135 = vsel %vm133, %v128, 0.0
    %v136 = vsel %vm134, %v127, 0.0
    %v137 = vpack.c.bf16 %v136, %v135
    %v138 = vld [vmem:[#allocation5] sm:$0xf]
    %v139 = vld [vmem:[#allocation5 + $0x4] sm:$0xf]
    %v140 = vld [vmem:[#allocation5 + $0x8] sm:$0xf]
    %v141 = vld [vmem:[#allocation5 + $0xc] sm:$0xf]
    %s142 = scalar_lea.vmem [#allocation5], 16
    %v143 = vld [vmem:[%s142] sm:$0xf]
    %v144 = vld [vmem:[%s142 + $0x4] sm:$0xf]
    %v145 = vld [vmem:[%s142 + $0x8] sm:$0xf]
    %v146 = vld [vmem:[%s142 + $0xc] sm:$0xf]
    %v151 = vunpack.c.l.b16 %v143
    %v152 = vunpack.c.l.b16 %v144
    %v153 = vunpack.c.l.b16 %v145
    %v154 = vunpack.c.l.b16 %v146
    %v155 = vpack.c.b16 %v152, %v151
    %v156 = vpack.c.b16 %v154, %v153
    %vm159 = vcmask 261120
    %v161 = vsel %vm159, %v123, 0
    %163 = vmatprep.subr.bf16.mxu0 0
    %164 = vmatpush1.bf16.msra.mxu0 %v155
    %165 = vmatprep.subr.bf16.mxu0 0
    %166 = vmatpush1.bf16.msra.mxu0 %v156
    %167 = vmatprep.subr.bf16.mxu0 0
    %168 = vmatpush1.bf16.msra.mxu0 0
    %169 = vmatprep.subr.bf16.mxu0 0
    %170 = vmatpush1.bf16.msra.mxu0 0
    %171 = vmatprep.subr.bf16.mxu0 0
    %172 = vmatpush1.bf16.msra.mxu0 0
    %173 = vmatprep.subr.bf16.mxu0 0
    %174 = vmatpush1.bf16.msra.mxu0 0
    %175 = vmatprep.subr.bf16.mxu0 0
    %176 = vmatpush1.bf16.msra.mxu0 0
    %177 = vmatprep.subr.bf16.mxu0 0
    %178 = vmatpush1.bf16.msra.mxu0 0
    %179 = vmatprep.subr.bf16.mxu0 0
    %180 = vmatpush1.bf16.msra.mxu0 0
    %181 = vmatprep.subr.bf16.mxu0 0
    %182 = vmatpush1.bf16.msra.mxu0 0
    %183 = vmatprep.subr.bf16.mxu0 0
    %184 = vmatpush1.bf16.msra.mxu0 0
    %185 = vmatprep.subr.bf16.mxu0 0
    %186 = vmatpush1.bf16.msra.mxu0 0
    %187 = vmatprep.subr.bf16.mxu0 0
    %188 = vmatpush1.bf16.msra.mxu0 0
    %189 = vmatprep.subr.bf16.mxu0 0
    %190 = vmatpush1.bf16.msra.mxu0 0
    %191 = vmatprep.subr.bf16.mxu0 0
    %192 = vmatpush1.bf16.msra.mxu0 0
    %193 = vmatprep.subr.bf16.mxu0 0
    %194 = vmatpush1.bf16.msra.mxu0 0
    %195 = vmatprep.mubr.bf16.mxu0 0
    %196 = vmatmul.mubr.bf16.gmra.mrb[0].mxu0 %v161
    %v197 = vpop.f32.mrb[0].mxu0
    %v198 = vadd.f32 0.0, %v197
    %v199 = vpop.f32.mrb[0].mxu0
    %v200 = vpop.f32.mrb[0].mxu0
    %v201 = vadd.f32 0.0, %v200
    %v202 = vpop.f32.mrb[0].mxu0
    %203 = vdwg.mxu0
    %v208 = vunpack.c.l.b16 %v138
    %v209 = vunpack.c.l.b16 %v139
    %v210 = vunpack.c.l.b16 %v140
    %v211 = vunpack.c.l.b16 %v141
    %v212 = vpack.c.b16 %v209, %v208
    %v213 = vpack.c.b16 %v211, %v210
    %v217 = vsel %vm159, %v137, 0
    %219 = vmatprep.subr.bf16.mxu0 0
    %220 = vmatpush1.bf16.msra.mxu0 %v212
    %221 = vmatprep.subr.bf16.mxu0 0
    %222 = vmatpush1.bf16.msra.mxu0 %v213
    %223 = vmatprep.subr.bf16.mxu0 0
    %224 = vmatpush1.bf16.msra.mxu0 0
    %225 = vmatprep.subr.bf16.mxu0 0
    %226 = vmatpush1.bf16.msra.mxu0 0
    %227 = vmatprep.subr.bf16.mxu0 0
    %228 = vmatpush1.bf16.msra.mxu0 0
    %229 = vmatprep.subr.bf16.mxu0 0
    %230 = vmatpush1.bf16.msra.mxu0 0
    %231 = vmatprep.subr.bf16.mxu0 0
    %232 = vmatpush1.bf16.msra.mxu0 0
    %233 = vmatprep.subr.bf16.mxu0 0
    %234 = vmatpush1.bf16.msra.mxu0 0
    %235 = vmatprep.subr.bf16.mxu0 0
    %236 = vmatpush1.bf16.msra.mxu0 0
    %237 = vmatprep.subr.bf16.mxu0 0
    %238 = vmatpush1.bf16.msra.mxu0 0
    %239 = vmatprep.subr.bf16.mxu0 0
    %240 = vmatpush1.bf16.msra.mxu0 0
    %241 = vmatprep.subr.bf16.mxu0 0
    %242 = vmatpush1.bf16.msra.mxu0 0
    %243 = vmatprep.subr.bf16.mxu0 0
    %244 = vmatpush1.bf16.msra.mxu0 0
    %245 = vmatprep.subr.bf16.mxu0 0
    %246 = vmatpush1.bf16.msra.mxu0 0
    %247 = vmatprep.subr.bf16.mxu0 0
    %248 = vmatpush1.bf16.msra.mxu0 0
    %249 = vmatprep.subr.bf16.mxu0 0
    %250 = vmatpush1.bf16.msra.mxu0 0
    %251 = vmatprep.mubr.bf16.mxu0 0
    %252 = vmatmul.mubr.bf16.gmra.mrb[0].mxu0 %v217
    %v253 = vpop.f32.mrb[0].mxu0
    %v254 = vadd.f32 %v198, %v253
    %v255 = vpop.f32.mrb[0].mxu0
    %v256 = vpop.f32.mrb[0].mxu0
    %v257 = vadd.f32 %v201, %v256
    %v258 = vpop.f32.mrb[0].mxu0
    %259 = vdwg.mxu0
    %v260 = vrot.slane %v118, 1
    %v261 = vrot.slane %v119, 1
    %vm262 = vcmp.lt.s32.totalorder %v116, 7
    %v263 = vsel %vm262, %v260, %v261
    %v264 = vsel %vm262, %v261, %v260
    %vm265 = vcmp.lt.s32.totalorder %v116, 15
    %vm266 = vcmp.lt.s32.totalorder %v117, 15
    %v267 = vsel %vm265, 1, 0
    %v268 = vsel %vm266, 1, 0
    %vm269 = vcmp.eq.s32.totalorder %v267, 1
    %vm270 = vcmp.eq.s32.totalorder %v268, 1
    %v271 = vsel %vm269, %v263, 0.0
    %v272 = vsel %vm270, %v264, 0.0
    %v273 = vpack.c.bf16 %v272, %v271
    %s274 = scalar_lea.vmem [#allocation5], 32
    %v275 = vld [vmem:[%s274] sm:$0xf]
    %v276 = vld [vmem:[%s274 + $0x4] sm:$0xf]
    %v277 = vld [vmem:[%s274 + $0x8] sm:$0xf]
    %v278 = vld [vmem:[%s274 + $0xc] sm:$0xf]
    %v283 = vunpack.c.l.b16 %v275
    %v284 = vunpack.c.l.b16 %v276
    %v285 = vunpack.c.l.b16 %v277
    %v286 = vunpack.c.l.b16 %v278
    %v287 = vpack.c.b16 %v284, %v283
    %v288 = vpack.c.b16 %v286, %v285
    %v292 = vsel %vm159, %v273, 0
    %294 = vmatprep.subr.bf16.mxu0 0
    %295 = vmatpush1.bf16.msra.mxu0 %v287
    %296 = vmatprep.subr.bf16.mxu0 0
    %297 = vmatpush1.bf16.msra.mxu0 %v288
    %298 = vmatprep.subr.bf16.mxu0 0
    %299 = vmatpush1.bf16.msra.mxu0 0
    %300 = vmatprep.subr.bf16.mxu0 0
    %301 = vmatpush1.bf16.msra.mxu0 0
    %302 = vmatprep.subr.bf16.mxu0 0
    %303 = vmatpush1.bf16.msra.mxu0 0
    %304 = vmatprep.subr.bf16.mxu0 0
    %305 = vmatpush1.bf16.msra.mxu0 0
    %306 = vmatprep.subr.bf16.mxu0 0
    %307 = vmatpush1.bf16.msra.mxu0 0
    %308 = vmatprep.subr.bf16.mxu0 0
    %309 = vmatpush1.bf16.msra.mxu0 0
    %310 = vmatprep.subr.bf16.mxu0 0
    %311 = vmatpush1.bf16.msra.mxu0 0
    %312 = vmatprep.subr.bf16.mxu0 0
    %313 = vmatpush1.bf16.msra.mxu0 0
    %314 = vmatprep.subr.bf16.mxu0 0
    %315 = vmatpush1.bf16.msra.mxu0 0
    %316 = vmatprep.subr.bf16.mxu0 0
    %317 = vmatpush1.bf16.msra.mxu0 0
    %318 = vmatprep.subr.bf16.mxu0 0
    %319 = vmatpush1.bf16.msra.mxu0 0
    %320 = vmatprep.subr.bf16.mxu0 0
    %321 = vmatpush1.bf16.msra.mxu0 0
    %322 = vmatprep.subr.bf16.mxu0 0
    %323 = vmatpush1.bf16.msra.mxu0 0
    %324 = vmatprep.subr.bf16.mxu0 0
    %325 = vmatpush1.bf16.msra.mxu0 0
    %326 = vmatprep.mubr.bf16.mxu0 0
    %327 = vmatmul.mubr.bf16.gmra.mrb[0].mxu0 %v292
    %v328 = vpop.f32.mrb[0].mxu0
    %v329 = vadd.f32 0.0, %v328
    %v330 = vpop.f32.mrb[0].mxu0
    %v331 = vpop.f32.mrb[0].mxu0
    %v332 = vadd.f32 0.0, %v331
    %v333 = vpop.f32.mrb[0].mxu0
    %334 = vdwg.mxu0
    %v335 = vadd.f32 %v254, %v329
    %v336 = vadd.f32 %v257, %v332
    %v337 = vlaneseq
    %v338 = vshrl.u32 %v337, 7
    %v339 = vsub.s32 0, %v338
    %v340 = vrot.slane %v120, %v339
    %v341 = vadd.f32 %v335, %v340
    %v342 = vadd.f32 %v336, %v340
    %vm343 = vcmask 523264
    %v345 = vsel %vm343, %v341, 0
    %v348 = vsel %vm343, %v342, 0
    %350 = vmatprep.subr.mxu0 0.0
    %351 = vmatpush1.msra.mxu0 %v107
    %352 = vmatprep.subr.mxu0 0.0
    %353 = vmatpush1.msra.mxu0 %v108
    %354 = vmatprep.subr.mxu0 0.0
    %355 = vmatpush1.msra.mxu0 %v109
    %356 = vmatprep.subr.mxu0 0.0
    %357 = vmatpush1.msra.mxu0 %v110
    %358 = vmatprep.subr.mxu0 0.0
    %359 = vmatpush1.msra.mxu0 %v111
    %360 = vmatprep.subr.mxu0 0.0
    %361 = vmatpush1.msra.mxu0 %v112
    %362 = vmatprep.subr.mxu0 0.0
    %363 = vmatpush1.msra.mxu0 %v113
    %364 = vmatprep.subr.mxu0 0.0
    %365 = vmatpush1.msra.mxu0 %v114
    %366 = vmatprep.subr.mxu0 0.0
    %367 = vmatpush1.msra.mxu0 0.0
    %368 = vmatprep.subr.mxu0 0.0
    %369 = vmatpush1.msra.mxu0 0.0
    %370 = vmatprep.subr.mxu0 0.0
    %371 = vmatpush1.msra.mxu0 0.0
    %372 = vmatprep.subr.mxu0 0.0
    %373 = vmatpush1.msra.mxu0 0.0
    %374 = vmatprep.subr.mxu0 0.0
    %375 = vmatpush1.msra.mxu0 0.0
    %376 = vmatprep.subr.mxu0 0.0
    %377 = vmatpush1.msra.mxu0 0.0
    %378 = vmatprep.subr.mxu0 0.0
    %379 = vmatpush1.msra.mxu0 0.0
    %380 = vmatprep.subr.mxu0 0.0
    %381 = vmatpush1.msra.mxu0 0.0
    %382 = vmatprep.subr.mxu0 0.0
    %383 = vmatpush1.msra.mxu0 0.0
    %384 = vmatprep.subr.mxu0 0.0
    %385 = vmatpush1.msra.mxu0 0.0
    %386 = vmatprep.subr.mxu0 0.0
    %387 = vmatpush1.msra.mxu0 0.0
    %388 = vmatprep.subr.mxu0 0.0
    %389 = vmatpush1.msra.mxu0 0.0
    %390 = vmatprep.subr.mxu0 0.0
    %391 = vmatpush1.msra.mxu0 0.0
    %392 = vmatprep.subr.mxu0 0.0
    %393 = vmatpush1.msra.mxu0 0.0
    %394 = vmatprep.subr.mxu0 0.0
    %395 = vmatpush1.msra.mxu0 0.0
    %396 = vmatprep.subr.mxu0 0.0
    %397 = vmatpush1.msra.mxu0 0.0
    %398 = vmatprep.subr.mxu0 0.0
    %399 = vmatpush1.msra.mxu0 0.0
    %400 = vmatprep.subr.mxu0 0.0
    %401 = vmatpush1.msra.mxu0 0.0
    %402 = vmatprep.subr.mxu0 0.0
    %403 = vmatpush1.msra.mxu0 0.0
    %404 = vmatprep.subr.mxu0 0.0
    %405 = vmatpush1.msra.mxu0 0.0
    %406 = vmatprep.subr.mxu0 0.0
    %407 = vmatpush1.msra.mxu0 0.0
    %408 = vmatprep.subr.mxu0 0.0
    %409 = vmatpush1.msra.mxu0 0.0
    %410 = vmatprep.subr.mxu0 0.0
    %411 = vmatpush1.msra.mxu0 0.0
    %412 = vmatprep.subr.mxu0 0.0
    %413 = vmatpush1.msra.mxu0 0.0
    %414 = vmatprep.mubr.f32.mxu0 0.0
    %415 = vmatmul.mubr.f32.gmra.mrb[0].mxu0 %v345
    %v416 = vpop.f32.mrb[0].mxu0
    %v417 = vadd.f32 0.0, %v416
    %v418 = vpop.f32.mrb[0].mxu0
    %419 = vmatprep.mubr.f32.mxu0 0.0
    %420 = vmatmul.mubr.f32.gmra.mrb[0].mxu0 %v348
    %v421 = vpop.f32.mrb[0].mxu0
    %v422 = vadd.f32 0.0, %v421
    %v423 = vpop.f32.mrb[0].mxu0
    %424 = vdwg.mxu0
    %v425 = vmul.f32 %v341, %v341
    %v426 = vmul.f32 %v342, %v342
    %v428 = vsel %vm343, %v425, 0
    %v431 = vsel %vm343, %v426, 0
    %433 = vmatprep.subr.mxu0 0.0
    %434 = vmatpush1.msra.mxu0 %v107
    %435 = vmatprep.subr.mxu0 0.0
    %436 = vmatpush1.msra.mxu0 %v108
    %437 = vmatprep.subr.mxu0 0.0
    %438 = vmatpush1.msra.mxu0 %v109
    %439 = vmatprep.subr.mxu0 0.0
    %440 = vmatpush1.msra.mxu0 %v110
    %441 = vmatprep.subr.mxu0 0.0
    %442 = vmatpush1.msra.mxu0 %v111
    %443 = vmatprep.subr.mxu0 0.0
    %444 = vmatpush1.msra.mxu0 %v112
    %445 = vmatprep.subr.mxu0 0.0
    %446 = vmatpush1.msra.mxu0 %v113
    %447 = vmatprep.subr.mxu0 0.0
    %448 = vmatpush1.msra.mxu0 %v114
    %449 = vmatprep.subr.mxu0 0.0
    %450 = vmatpush1.msra.mxu0 0.0
    %451 = vmatprep.subr.mxu0 0.0
    %452 = vmatpush1.msra.mxu0 0.0
    %453 = vmatprep.subr.mxu0 0.0
    %454 = vmatpush1.msra.mxu0 0.0
    %455 = vmatprep.subr.mxu0 0.0
    %456 = vmatpush1.msra.mxu0 0.0
    %457 = vmatprep.subr.mxu0 0.0
    %458 = vmatpush1.msra.mxu0 0.0
    %459 = vmatprep.subr.mxu0 0.0
    %460 = vmatpush1.msra.mxu0 0.0
    %461 = vmatprep.subr.mxu0 0.0
    %462 = vmatpush1.msra.mxu0 0.0
    %463 = vmatprep.subr.mxu0 0.0
    %464 = vmatpush1.msra.mxu0 0.0
    %465 = vmatprep.subr.mxu0 0.0
    %466 = vmatpush1.msra.mxu0 0.0
    %467 = vmatprep.subr.mxu0 0.0
    %468 = vmatpush1.msra.mxu0 0.0
    %469 = vmatprep.subr.mxu0 0.0
    %470 = vmatpush1.msra.mxu0 0.0
    %471 = vmatprep.subr.mxu0 0.0
    %472 = vmatpush1.msra.mxu0 0.0
    %473 = vmatprep.subr.mxu0 0.0
    %474 = vmatpush1.msra.mxu0 0.0
    %475 = vmatprep.subr.mxu0 0.0
    %476 = vmatpush1.msra.mxu0 0.0
    %477 = vmatprep.subr.mxu0 0.0
    %478 = vmatpush1.msra.mxu0 0.0
    %479 = vmatprep.subr.mxu0 0.0
    %480 = vmatpush1.msra.mxu0 0.0
    %481 = vmatprep.subr.mxu0 0.0
    %482 = vmatpush1.msra.mxu0 0.0
    %483 = vmatprep.subr.mxu0 0.0
    %484 = vmatpush1.msra.mxu0 0.0
    %485 = vmatprep.subr.mxu0 0.0
    %486 = vmatpush1.msra.mxu0 0.0
    %487 = vmatprep.subr.mxu0 0.0
    %488 = vmatpush1.msra.mxu0 0.0
    %489 = vmatprep.subr.mxu0 0.0
    %490 = vmatpush1.msra.mxu0 0.0
    %491 = vmatprep.subr.mxu0 0.0
    %492 = vmatpush1.msra.mxu0 0.0
    %493 = vmatprep.subr.mxu0 0.0
    %494 = vmatpush1.msra.mxu0 0.0
    %495 = vmatprep.subr.mxu0 0.0
    %496 = vmatpush1.msra.mxu0 0.0
    %497 = vmatprep.mubr.f32.mxu0 0.0
    %498 = vmatmul.mubr.f32.gmra.mrb[0].mxu0 %v428
    %v499 = vpop.f32.mrb[0].mxu0
    %v500 = vadd.f32 0.0, %v499
    %v501 = vpop.f32.mrb[0].mxu0
    %502 = vmatprep.mubr.f32.mxu0 0.0
    %503 = vmatmul.mubr.f32.gmra.mrb[0].mxu0 %v431
    %v504 = vpop.f32.mrb[0].mxu0
    %v505 = vadd.f32 0.0, %v504
    %v506 = vpop.f32.mrb[0].mxu0
    %507 = vdwg.mxu0
    %v508 = vsel %vm343, %v417, 0.0
    %v509 = vsel %vm343, %v422, 0.0
    %v510 = vadd.f32 %v508, %v509
    %v511 = vrot.slane %v510, 4
    %v512 = vadd.f32 %v510, %v511
    %v513 = vrot.slane %v512, 2
    %v514 = vadd.f32 %v512, %v513
    %v515 = vrot.slane %v514, 1
    %v516 = vadd.f32 %v514, %v515
    %v517 = vsel %vm343, %v500, 0.0
    %v518 = vsel %vm343, %v505, 0.0
    %v519 = vadd.f32 %v517, %v518
    %v520 = vrot.slane %v519, 4
    %v521 = vadd.f32 %v519, %v520
    %v522 = vrot.slane %v521, 2
    %v523 = vadd.f32 %v521, %v522
    %v524 = vrot.slane %v523, 1
    %v525 = vadd.f32 %v523, %v524
    %v526 = vmul.f32 %v516, %v516
    %v527 = vsub.f32 %v525, %v526
    %v528 = vmax.f32 %v527, 0.0
    %v529 = vadd.f32 %v528, 1e-05
    %v530 = vrsqrt.pop %v529
    %v531 = vmul.f32 %v530, %v121
    %v532 = vmul.f32 %v516, %v531
    %v533 = vsub.f32 %v122, %v532
    %v534 = vlaneseq
    %v535 = vshrl.u32 %v534, 7
    %v536 = vsub.s32 0, %v535
    %v537 = vrot.slane %v531, %v536
    %v538 = vmul.f32 %v341, %v537
    %v539 = vmul.f32 %v342, %v537
    %v540 = vlaneseq
    %v541 = vshrl.u32 %v540, 7
    %v542 = vsub.s32 0, %v541
    %v543 = vrot.slane %v533, %v542
    %v544 = vadd.f32 %v538, %v543
    %v545 = vadd.f32 %v539, %v543
    %v546 = vxor.u32 %v544, 2147483648
    %v547 = vxor.u32 %v545, 2147483648
    %v548 = vmul.f32 %v546, 1.442695
    %v549 = vpow.pop %v548
    %v550 = vmul.f32 %v547, 1.442695
    %v551 = vpow.pop %v550
    %v552 = vadd.f32 %v549, 1.0
    %v553 = vadd.f32 %v551, 1.0
    %v554 = vrcp.pop %v552
    %v555 = vmul.f32 1.0, %v554
    %v556 = vrcp.pop %v553
    %v557 = vmul.f32 1.0, %v556
    %v558 = vmul.f32 %v544, %v555
    %v559 = vmul.f32 %v545, %v557
    %v560 = vld [vmem:[#allocation10 + $0x3] sm:$0x1]
    %v561 = vld [vmem:[#allocation7] sm:$0xf]
    %v562 = vld [vmem:[#allocation7 + $0x4] sm:$0xf]
    %v563 = vld [vmem:[#allocation7 + $0x8] sm:$0xf]
    %v564 = vld [vmem:[#allocation7 + $0xc] sm:$0xf]
    %v565 = vlaneseq
    %v566 = vshrl.u32 %v565, 7
    %v567 = vsub.s32 0, %v566
    %v568 = vrot.slane %v560, %v567
    %v573 = vunpack.c.l.b16 %v561
    %v574 = vunpack.c.l.b16 %v562
    %v575 = vunpack.c.l.b16 %v563
    %v576 = vunpack.c.l.b16 %v564
    %v577 = vpack.c.b16 %v574, %v573
    %v578 = vpack.c.b16 %v576, %v575
    %581 = vmatprep.subr.bf16.mxu0 0
    %582 = vmatpush1.bf16.msra.mxu0 %v577
    %583 = vmatprep.subr.bf16.mxu0 0
    %584 = vmatpush1.bf16.msra.mxu0 %v578
    %585 = vmatprep.subr.bf16.mxu0 0
    %586 = vmatpush1.bf16.msra.mxu0 0
    %587 = vmatprep.subr.bf16.mxu0 0
    %588 = vmatpush1.bf16.msra.mxu0 0
    %589 = vmatprep.subr.bf16.mxu0 0
    %590 = vmatpush1.bf16.msra.mxu0 0
    %591 = vmatprep.subr.bf16.mxu0 0
    %592 = vmatpush1.bf16.msra.mxu0 0
    %593 = vmatprep.subr.bf16.mxu0 0
    %594 = vmatpush1.bf16.msra.mxu0 0
    %595 = vmatprep.subr.bf16.mxu0 0
    %596 = vmatpush1.bf16.msra.mxu0 0
    %597 = vmatprep.subr.bf16.mxu0 0
    %598 = vmatpush1.bf16.msra.mxu0 0
    %599 = vmatprep.subr.bf16.mxu0 0
    %600 = vmatpush1.bf16.msra.mxu0 0
    %601 = vmatprep.subr.bf16.mxu0 0
    %602 = vmatpush1.bf16.msra.mxu0 0
    %603 = vmatprep.subr.bf16.mxu0 0
    %604 = vmatpush1.bf16.msra.mxu0 0
    %605 = vmatprep.subr.bf16.mxu0 0
    %606 = vmatpush1.bf16.msra.mxu0 0
    %607 = vmatprep.subr.bf16.mxu0 0
    %608 = vmatpush1.bf16.msra.mxu0 0
    %609 = vmatprep.subr.bf16.mxu0 0
    %610 = vmatpush1.bf16.msra.mxu0 0
    %611 = vmatprep.subr.bf16.mxu0 0
    %612 = vmatpush1.bf16.msra.mxu0 0
    %613 = vmatprep.mubr.bf16.mxu0 0
    %614 = vmatmul.mubr.bf16.gmra.mrb[0].mxu0 %v161
    %v615 = vpop.f32.mrb[0].mxu0
    %v616 = vadd.f32 %v568, %v615
    %v617 = vpop.f32.mrb[0].mxu0
    %v618 = vpop.f32.mrb[0].mxu0
    %v619 = vadd.f32 %v568, %v618
    %v620 = vpop.f32.mrb[0].mxu0
    %621 = vdwg.mxu0
    %v622 = vadd.f32 %v558, %v616
    %v623 = vadd.f32 %v559, %v619
    %v624 = vld [vmem:[#allocation10 + $0x4] sm:$0x1]
    %v625 = vld [vmem:[#allocation10 + $0x5] sm:$0x1]
    %v626 = vld [vmem:[#allocation10 + $0x6] sm:$0x1]
    %v627 = vpack.c.bf16 %v623, %v622
    %v628 = vrot.slane %v622, 6
    %v629 = vrot.slane %v623, 6
    %vm630 = vcmp.lt.s32.totalorder %v116, 2
    %v631 = vsel %vm630, %v628, %v629
    %v632 = vsel %vm630, %v629, %v628
    %vm633 = vcmp.ge.s32.totalorder %v116, 2
    %vm634 = vcmp.ge.s32.totalorder %v117, 2
    %v635 = vsel %vm633, 1, 0
    %v636 = vsel %vm634, 1, 0
    %vm637 = vcmp.eq.s32.totalorder %v635, 1
    %vm638 = vcmp.eq.s32.totalorder %v636, 1
    %v639 = vsel %vm637, %v632, 0.0
    %v640 = vsel %vm638, %v631, 0.0
    %v641 = vpack.c.bf16 %v640, %v639
    %v642 = vld [vmem:[#allocation8] sm:$0xf]
    %v643 = vld [vmem:[#allocation8 + $0x4] sm:$0xf]
    %v644 = vld [vmem:[#allocation8 + $0x8] sm:$0xf]
    %v645 = vld [vmem:[#allocation8 + $0xc] sm:$0xf]
    %v646 = vld [vmem:[#allocation8 + $0x10] sm:$0xf]
    %v647 = vld [vmem:[#allocation8 + $0x14] sm:$0xf]
    %v648 = vld [vmem:[#allocation8 + $0x18] sm:$0xf]
    %v649 = vld [vmem:[#allocation8 + $0x1c] sm:$0xf]
    %s650 = scalar_lea.vmem [#allocation8], 32
    %v651 = vld [vmem:[%s650] sm:$0xf]
    %v652 = vld [vmem:[%s650 + $0x4] sm:$0xf]
    %v653 = vld [vmem:[%s650 + $0x8] sm:$0xf]
    %v654 = vld [vmem:[%s650 + $0xc] sm:$0xf]
    %v655 = vld [vmem:[%s650 + $0x10] sm:$0xf]
    %v656 = vld [vmem:[%s650 + $0x14] sm:$0xf]
    %v657 = vld [vmem:[%s650 + $0x18] sm:$0xf]
    %v658 = vld [vmem:[%s650 + $0x1c] sm:$0xf]
    %v667 = vunpack.c.l.b16 %v651
    %v668 = vunpack.c.l.b16 %v652
    %v669 = vunpack.c.l.b16 %v653
    %v670 = vunpack.c.l.b16 %v654
    %v671 = vunpack.c.l.b16 %v655
    %v672 = vunpack.c.l.b16 %v656
    %v673 = vunpack.c.l.b16 %v657
    %v674 = vunpack.c.l.b16 %v658
    %v675 = vpack.c.b16 %v668, %v667
    %v676 = vpack.c.b16 %v670, %v669
    %v677 = vpack.c.b16 %v672, %v671
    %v678 = vpack.c.b16 %v674, %v673
    %v684 = vsel %vm343, %v627, 0
    %686 = vmatprep.subr.bf16.mxu0 0
    %687 = vmatpush1.bf16.msra.mxu0 %v675
    %688 = vmatprep.subr.bf16.mxu0 0
    %689 = vmatpush1.bf16.msra.mxu0 %v676
    %690 = vmatprep.subr.bf16.mxu0 0
    %691 = vmatpush1.bf16.msra.mxu0 %v677
    %692 = vmatprep.subr.bf16.mxu0 0
    %693 = vmatpush1.bf16.msra.mxu0 %v678
    %694 = vmatprep.subr.bf16.mxu0 0
    %695 = vmatpush1.bf16.msra.mxu0 0
    %696 = vmatprep.subr.bf16.mxu0 0
    %697 = vmatpush1.bf16.msra.mxu0 0
    %698 = vmatprep.subr.bf16.mxu0 0
    %699 = vmatpush1.bf16.msra.mxu0 0
    %700 = vmatprep.subr.bf16.mxu0 0
    %701 = vmatpush1.bf16.msra.mxu0 0
    %702 = vmatprep.subr.bf16.mxu0 0
    %703 = vmatpush1.bf16.msra.mxu0 0
    %704 = vmatprep.subr.bf16.mxu0 0
    %705 = vmatpush1.bf16.msra.mxu0 0
    %706 = vmatprep.subr.bf16.mxu0 0
    %707 = vmatpush1.bf16.msra.mxu0 0
    %708 = vmatprep.subr.bf16.mxu0 0
    %709 = vmatpush1.bf16.msra.mxu0 0
    %710 = vmatprep.subr.bf16.mxu0 0
    %711 = vmatpush1.bf16.msra.mxu0 0
    %712 = vmatprep.subr.bf16.mxu0 0
    %713 = vmatpush1.bf16.msra.mxu0 0
    %714 = vmatprep.subr.bf16.mxu0 0
    %715 = vmatpush1.bf16.msra.mxu0 0
    %716 = vmatprep.subr.bf16.mxu0 0
    %717 = vmatpush1.bf16.msra.mxu0 0
    %718 = vmatprep.mubr.bf16.mxu0 0
    %719 = vmatmul.mubr.bf16.gmra.mrb[0].mxu0 %v684
    %v720 = vpop.f32.mrb[0].mxu0
    %v721 = vadd.f32 0.0, %v720
    %v722 = vpop.f32.mrb[0].mxu0
    %v723 = vpop.f32.mrb[0].mxu0
    %v724 = vadd.f32 0.0, %v723
    %v725 = vpop.f32.mrb[0].mxu0
    %726 = vdwg.mxu0
    %v735 = vunpack.c.l.b16 %v642
    %v736 = vunpack.c.l.b16 %v643
    %v737 = vunpack.c.l.b16 %v644
    %v738 = vunpack.c.l.b16 %v645
    %v739 = vunpack.c.l.b16 %v646
    %v740 = vunpack.c.l.b16 %v647
    %v741 = vunpack.c.l.b16 %v648
    %v742 = vunpack.c.l.b16 %v649
    %v743 = vpack.c.b16 %v736, %v735
    %v744 = vpack.c.b16 %v738, %v737
    %v745 = vpack.c.b16 %v740, %v739
    %v746 = vpack.c.b16 %v742, %v741
    %v752 = vsel %vm343, %v641, 0
    %754 = vmatprep.subr.bf16.mxu0 0
    %755 = vmatpush1.bf16.msra.mxu0 %v743
    %756 = vmatprep.subr.bf16.mxu0 0
    %757 = vmatpush1.bf16.msra.mxu0 %v744
    %758 = vmatprep.subr.bf16.mxu0 0
    %759 = vmatpush1.bf16.msra.mxu0 %v745
    %760 = vmatprep.subr.bf16.mxu0 0
    %761 = vmatpush1.bf16.msra.mxu0 %v746
    %762 = vmatprep.subr.bf16.mxu0 0
    %763 = vmatpush1.bf16.msra.mxu0 0
    %764 = vmatprep.subr.bf16.mxu0 0
    %765 = vmatpush1.bf16.msra.mxu0 0
    %766 = vmatprep.subr.bf16.mxu0 0
    %767 = vmatpush1.bf16.msra.mxu0 0
    %768 = vmatprep.subr.bf16.mxu0 0
    %769 = vmatpush1.bf16.msra.mxu0 0
    %770 = vmatprep.subr.bf16.mxu0 0
    %771 = vmatpush1.bf16.msra.mxu0 0
    %772 = vmatprep.subr.bf16.mxu0 0
    %773 = vmatpush1.bf16.msra.mxu0 0
    %774 = vmatprep.subr.bf16.mxu0 0
    %775 = vmatpush1.bf16.msra.mxu0 0
    %776 = vmatprep.subr.bf16.mxu0 0
    %777 = vmatpush1.bf16.msra.mxu0 0
    %778 = vmatprep.subr.bf16.mxu0 0
    %779 = vmatpush1.bf16.msra.mxu0 0
    %780 = vmatprep.subr.bf16.mxu0 0
    %781 = vmatpush1.bf16.msra.mxu0 0
    %782 = vmatprep.subr.bf16.mxu0 0
    %783 = vmatpush1.bf16.msra.mxu0 0
    %784 = vmatprep.subr.bf16.mxu0 0
    %785 = vmatpush1.bf16.msra.mxu0 0
    %786 = vmatprep.mubr.bf16.mxu0 0
    %787 = vmatmul.mubr.bf16.gmra.mrb[0].mxu0 %v752
    %v788 = vpop.f32.mrb[0].mxu0
    %v789 = vadd.f32 %v721, %v788
    %v790 = vpop.f32.mrb[0].mxu0
    %v791 = vpop.f32.mrb[0].mxu0
    %v792 = vadd.f32 %v724, %v791
    %v793 = vpop.f32.mrb[0].mxu0
    %794 = vdwg.mxu0
    %v795 = vrot.slane %v622, 2
    %v796 = vrot.slane %v623, 2
    %vm797 = vcmp.lt.s32.totalorder %v116, 6
    %v798 = vsel %vm797, %v795, %v796
    %v799 = vsel %vm797, %v796, %v795
    %vm800 = vcmp.lt.s32.totalorder %v116, 14
    %vm801 = vcmp.lt.s32.totalorder %v117, 14
    %v802 = vsel %vm800, 1, 0
    %v803 = vsel %vm801, 1, 0
    %vm804 = vcmp.eq.s32.totalorder %v802, 1
    %vm805 = vcmp.eq.s32.totalorder %v803, 1
    %v806 = vsel %vm804, %v798, 0.0
    %v807 = vsel %vm805, %v799, 0.0
    %v808 = vpack.c.bf16 %v807, %v806
    %s809 = scalar_lea.vmem [#allocation8], 64
    %v810 = vld [vmem:[%s809] sm:$0xf]
    %v811 = vld [vmem:[%s809 + $0x4] sm:$0xf]
    %v812 = vld [vmem:[%s809 + $0x8] sm:$0xf]
    %v813 = vld [vmem:[%s809 + $0xc] sm:$0xf]
    %v814 = vld [vmem:[%s809 + $0x10] sm:$0xf]
    %v815 = vld [vmem:[%s809 + $0x14] sm:$0xf]
    %v816 = vld [vmem:[%s809 + $0x18] sm:$0xf]
    %v817 = vld [vmem:[%s809 + $0x1c] sm:$0xf]
    %v826 = vunpack.c.l.b16 %v810
    %v827 = vunpack.c.l.b16 %v811
    %v828 = vunpack.c.l.b16 %v812
    %v829 = vunpack.c.l.b16 %v813
    %v830 = vunpack.c.l.b16 %v814
    %v831 = vunpack.c.l.b16 %v815
    %v832 = vunpack.c.l.b16 %v816
    %v833 = vunpack.c.l.b16 %v817
    %v834 = vpack.c.b16 %v827, %v826
    %v835 = vpack.c.b16 %v829, %v828
    %v836 = vpack.c.b16 %v831, %v830
    %v837 = vpack.c.b16 %v833, %v832
    %v843 = vsel %vm343, %v808, 0
    %845 = vmatprep.subr.bf16.mxu0 0
    %846 = vmatpush1.bf16.msra.mxu0 %v834
    %847 = vmatprep.subr.bf16.mxu0 0
    %848 = vmatpush1.bf16.msra.mxu0 %v835
    %849 = vmatprep.subr.bf16.mxu0 0
    %850 = vmatpush1.bf16.msra.mxu0 %v836
    %851 = vmatprep.subr.bf16.mxu0 0
    %852 = vmatpush1.bf16.msra.mxu0 %v837
    %853 = vmatprep.subr.bf16.mxu0 0
    %854 = vmatpush1.bf16.msra.mxu0 0
    %855 = vmatprep.subr.bf16.mxu0 0
    %856 = vmatpush1.bf16.msra.mxu0 0
    %857 = vmatprep.subr.bf16.mxu0 0
    %858 = vmatpush1.bf16.msra.mxu0 0
    %859 = vmatprep.subr.bf16.mxu0 0
    %860 = vmatpush1.bf16.msra.mxu0 0
    %861 = vmatprep.subr.bf16.mxu0 0
    %862 = vmatpush1.bf16.msra.mxu0 0
    %863 = vmatprep.subr.bf16.mxu0 0
    %864 = vmatpush1.bf16.msra.mxu0 0
    %865 = vmatprep.subr.bf16.mxu0 0
    %866 = vmatpush1.bf16.msra.mxu0 0
    %867 = vmatprep.subr.bf16.mxu0 0
    %868 = vmatpush1.bf16.msra.mxu0 0
    %869 = vmatprep.subr.bf16.mxu0 0
    %870 = vmatpush1.bf16.msra.mxu0 0
    %871 = vmatprep.subr.bf16.mxu0 0
    %872 = vmatpush1.bf16.msra.mxu0 0
    %873 = vmatprep.subr.bf16.mxu0 0
    %874 = vmatpush1.bf16.msra.mxu0 0
    %875 = vmatprep.subr.bf16.mxu0 0
    %876 = vmatpush1.bf16.msra.mxu0 0
    %877 = vmatprep.mubr.bf16.mxu0 0
    %878 = vmatmul.mubr.bf16.gmra.mrb[0].mxu0 %v843
    %v879 = vpop.f32.mrb[0].mxu0
    %v880 = vadd.f32 0.0, %v879
    %v881 = vpop.f32.mrb[0].mxu0
    %v882 = vpop.f32.mrb[0].mxu0
    %v883 = vadd.f32 0.0, %v882
    %v884 = vpop.f32.mrb[0].mxu0
    %885 = vdwg.mxu0
    %v886 = vadd.f32 %v789, %v880
    %v887 = vadd.f32 %v792, %v883
    %v888 = vlaneseq
    %v889 = vshrl.u32 %v888, 7
    %v890 = vsub.s32 0, %v889
    %v891 = vrot.slane %v624, %v890
    %v892 = vadd.f32 %v886, %v891
    %v893 = vadd.f32 %v887, %v891
    %v895 = vsel %vm343, %v892, 0
    %v898 = vsel %vm343, %v893, 0
    %900 = vmatprep.subr.mxu0 0.0
    %901 = vmatpush1.msra.mxu0 %v107
    %902 = vmatprep.subr.mxu0 0.0
    %903 = vmatpush1.msra.mxu0 %v108
    %904 = vmatprep.subr.mxu0 0.0
    %905 = vmatpush1.msra.mxu0 %v109
    %906 = vmatprep.subr.mxu0 0.0
    %907 = vmatpush1.msra.mxu0 %v110
    %908 = vmatprep.subr.mxu0 0.0
    %909 = vmatpush1.msra.mxu0 %v111
    %910 = vmatprep.subr.mxu0 0.0
    %911 = vmatpush1.msra.mxu0 %v112
    %912 = vmatprep.subr.mxu0 0.0
    %913 = vmatpush1.msra.mxu0 %v113
    %914 = vmatprep.subr.mxu0 0.0
    %915 = vmatpush1.msra.mxu0 %v114
    %916 = vmatprep.subr.mxu0 0.0
    %917 = vmatpush1.msra.mxu0 0.0
    %918 = vmatprep.subr.mxu0 0.0
    %919 = vmatpush1.msra.mxu0 0.0
    %920 = vmatprep.subr.mxu0 0.0
    %921 = vmatpush1.msra.mxu0 0.0
    %922 = vmatprep.subr.mxu0 0.0
    %923 = vmatpush1.msra.mxu0 0.0
    %924 = vmatprep.subr.mxu0 0.0
    %925 = vmatpush1.msra.mxu0 0.0
    %926 = vmatprep.subr.mxu0 0.0
    %927 = vmatpush1.msra.mxu0 0.0
    %928 = vmatprep.subr.mxu0 0.0
    %929 = vmatpush1.msra.mxu0 0.0
    %930 = vmatprep.subr.mxu0 0.0
    %931 = vmatpush1.msra.mxu0 0.0
    %932 = vmatprep.subr.mxu0 0.0
    %933 = vmatpush1.msra.mxu0 0.0
    %934 = vmatprep.subr.mxu0 0.0
    %935 = vmatpush1.msra.mxu0 0.0
    %936 = vmatprep.subr.mxu0 0.0
    %937 = vmatpush1.msra.mxu0 0.0
    %938 = vmatprep.subr.mxu0 0.0
    %939 = vmatpush1.msra.mxu0 0.0
    %940 = vmatprep.subr.mxu0 0.0
    %941 = vmatpush1.msra.mxu0 0.0
    %942 = vmatprep.subr.mxu0 0.0
    %943 = vmatpush1.msra.mxu0 0.0
    %944 = vmatprep.subr.mxu0 0.0
    %945 = vmatpush1.msra.mxu0 0.0
    %946 = vmatprep.subr.mxu0 0.0
    %947 = vmatpush1.msra.mxu0 0.0
    %948 = vmatprep.subr.mxu0 0.0
    %949 = vmatpush1.msra.mxu0 0.0
    %950 = vmatprep.subr.mxu0 0.0
    %951 = vmatpush1.msra.mxu0 0.0
    %952 = vmatprep.subr.mxu0 0.0
    %953 = vmatpush1.msra.mxu0 0.0
    %954 = vmatprep.subr.mxu0 0.0
    %955 = vmatpush1.msra.mxu0 0.0
    %956 = vmatprep.subr.mxu0 0.0
    %957 = vmatpush1.msra.mxu0 0.0
    %958 = vmatprep.subr.mxu0 0.0
    %959 = vmatpush1.msra.mxu0 0.0
    %960 = vmatprep.subr.mxu0 0.0
    %961 = vmatpush1.msra.mxu0 0.0
    %962 = vmatprep.subr.mxu0 0.0
    %963 = vmatpush1.msra.mxu0 0.0
    %964 = vmatprep.mubr.f32.mxu0 0.0
    %965 = vmatmul.mubr.f32.gmra.mrb[0].mxu0 %v895
    %v966 = vpop.f32.mrb[0].mxu0
    %v967 = vadd.f32 0.0, %v966
    %v968 = vpop.f32.mrb[0].mxu0
    %969 = vmatprep.mubr.f32.mxu0 0.0
    %970 = vmatmul.mubr.f32.gmra.mrb[0].mxu0 %v898
    %v971 = vpop.f32.mrb[0].mxu0
    %v972 = vadd.f32 0.0, %v971
    %v973 = vpop.f32.mrb[0].mxu0
    %974 = vdwg.mxu0
    %v975 = vmul.f32 %v892, %v892
    %v976 = vmul.f32 %v893, %v893
    %v978 = vsel %vm343, %v975, 0
    %v981 = vsel %vm343, %v976, 0
    %983 = vmatprep.subr.mxu0 0.0
    %984 = vmatpush1.msra.mxu0 %v107
    %985 = vmatprep.subr.mxu0 0.0
    %986 = vmatpush1.msra.mxu0 %v108
    %987 = vmatprep.subr.mxu0 0.0
    %988 = vmatpush1.msra.mxu0 %v109
    %989 = vmatprep.subr.mxu0 0.0
    %990 = vmatpush1.msra.mxu0 %v110
    %991 = vmatprep.subr.mxu0 0.0
    %992 = vmatpush1.msra.mxu0 %v111
    %993 = vmatprep.subr.mxu0 0.0
    %994 = vmatpush1.msra.mxu0 %v112
    %995 = vmatprep.subr.mxu0 0.0
    %996 = vmatpush1.msra.mxu0 %v113
    %997 = vmatprep.subr.mxu0 0.0
    %998 = vmatpush1.msra.mxu0 %v114
    %999 = vmatprep.subr.mxu0 0.0
    %1000 = vmatpush1.msra.mxu0 0.0
    %1001 = vmatprep.subr.mxu0 0.0
    %1002 = vmatpush1.msra.mxu0 0.0
    %1003 = vmatprep.subr.mxu0 0.0
    %1004 = vmatpush1.msra.mxu0 0.0
    %1005 = vmatprep.subr.mxu0 0.0
    %1006 = vmatpush1.msra.mxu0 0.0
    %1007 = vmatprep.subr.mxu0 0.0
    %1008 = vmatpush1.msra.mxu0 0.0
    %1009 = vmatprep.subr.mxu0 0.0
    %1010 = vmatpush1.msra.mxu0 0.0
    %1011 = vmatprep.subr.mxu0 0.0
    %1012 = vmatpush1.msra.mxu0 0.0
    %1013 = vmatprep.subr.mxu0 0.0
    %1014 = vmatpush1.msra.mxu0 0.0
    %1015 = vmatprep.subr.mxu0 0.0
    %1016 = vmatpush1.msra.mxu0 0.0
    %1017 = vmatprep.subr.mxu0 0.0
    %1018 = vmatpush1.msra.mxu0 0.0
    %1019 = vmatprep.subr.mxu0 0.0
    %1020 = vmatpush1.msra.mxu0 0.0
    %1021 = vmatprep.subr.mxu0 0.0
    %1022 = vmatpush1.msra.mxu0 0.0
    %1023 = vmatprep.subr.mxu0 0.0
    %1024 = vmatpush1.msra.mxu0 0.0
    %1025 = vmatprep.subr.mxu0 0.0
    %1026 = vmatpush1.msra.mxu0 0.0
    %1027 = vmatprep.subr.mxu0 0.0
    %1028 = vmatpush1.msra.mxu0 0.0
    %1029 = vmatprep.subr.mxu0 0.0
    %1030 = vmatpush1.msra.mxu0 0.0
    %1031 = vmatprep.subr.mxu0 0.0
    %1032 = vmatpush1.msra.mxu0 0.0
    %1033 = vmatprep.subr.mxu0 0.0
    %1034 = vmatpush1.msra.mxu0 0.0
    %1035 = vmatprep.subr.mxu0 0.0
    %1036 = vmatpush1.msra.mxu0 0.0
    %1037 = vmatprep.subr.mxu0 0.0
    %1038 = vmatpush1.msra.mxu0 0.0
    %1039 = vmatprep.subr.mxu0 0.0
    %1040 = vmatpush1.msra.mxu0 0.0
    %1041 = vmatprep.subr.mxu0 0.0
    %1042 = vmatpush1.msra.mxu0 0.0
    %1043 = vmatprep.subr.mxu0 0.0
    %1044 = vmatpush1.msra.mxu0 0.0
    %1045 = vmatprep.subr.mxu0 0.0
    %1046 = vmatpush1.msra.mxu0 0.0
    %1047 = vmatprep.mubr.f32.mxu0 0.0
    %1048 = vmatmul.mubr.f32.gmra.mrb[0].mxu0 %v978
    %v1049 = vpop.f32.mrb[0].mxu0
    %v1050 = vadd.f32 0.0, %v1049
    %v1051 = vpop.f32.mrb[0].mxu0
    %1052 = vmatprep.mubr.f32.mxu0 0.0
    %1053 = vmatmul.mubr.f32.gmra.mrb[0].mxu0 %v981
    %v1054 = vpop.f32.mrb[0].mxu0
    %v1055 = vadd.f32 0.0, %v1054
    %v1056 = vpop.f32.mrb[0].mxu0
    %1057 = vdwg.mxu0
    %v1058 = vsel %vm343, %v967, 0.0
    %v1059 = vsel %vm343, %v972, 0.0
    %v1060 = vadd.f32 %v1058, %v1059
    %v1061 = vrot.slane %v1060, 4
    %v1062 = vadd.f32 %v1060, %v1061
    %v1063 = vrot.slane %v1062, 2
    %v1064 = vadd.f32 %v1062, %v1063
    %v1065 = vrot.slane %v1064, 1
    %v1066 = vadd.f32 %v1064, %v1065
    %v1067 = vsel %vm343, %v1050, 0.0
    %v1068 = vsel %vm343, %v1055, 0.0
    %v1069 = vadd.f32 %v1067, %v1068
    %v1070 = vrot.slane %v1069, 4
    %v1071 = vadd.f32 %v1069, %v1070
    %v1072 = vrot.slane %v1071, 2
    %v1073 = vadd.f32 %v1071, %v1072
    %v1074 = vrot.slane %v1073, 1
    %v1075 = vadd.f32 %v1073, %v1074
    %v1076 = vmul.f32 %v1066, %v1066
    %v1077 = vsub.f32 %v1075, %v1076
    %v1078 = vmax.f32 %v1077, 0.0
    %v1079 = vadd.f32 %v1078, 1e-05
    %v1080 = vrsqrt.pop %v1079
    %v1081 = vmul.f32 %v1080, %v625
    %v1082 = vmul.f32 %v1066, %v1081
    %v1083 = vsub.f32 %v626, %v1082
    %v1084 = vlaneseq
    %v1085 = vshrl.u32 %v1084, 7
    %v1086 = vsub.s32 0, %v1085
    %v1087 = vrot.slane %v1081, %v1086
    %v1088 = vmul.f32 %v892, %v1087
    %v1089 = vmul.f32 %v893, %v1087
    %v1090 = vlaneseq
    %v1091 = vshrl.u32 %v1090, 7
    %v1092 = vsub.s32 0, %v1091
    %v1093 = vrot.slane %v1083, %v1092
    %v1094 = vadd.f32 %v1088, %v1093
    %v1095 = vadd.f32 %v1089, %v1093
    %v1096 = vxor.u32 %v1094, 2147483648
    %v1097 = vxor.u32 %v1095, 2147483648
    %v1098 = vmul.f32 %v1096, 1.442695
    %v1099 = vpow.pop %v1098
    %v1100 = vmul.f32 %v1097, 1.442695
    %v1101 = vpow.pop %v1100
    %v1102 = vadd.f32 %v1099, 1.0
    %v1103 = vadd.f32 %v1101, 1.0
    %v1104 = vrcp.pop %v1102
    %v1105 = vmul.f32 1.0, %v1104
    %v1106 = vrcp.pop %v1103
    %v1107 = vmul.f32 1.0, %v1106
    %v1108 = vmul.f32 %v1094, %v1105
    %v1109 = vmul.f32 %v1095, %v1107
    %v1110 = vadd.f32 %v1108, %v622
    %v1111 = vadd.f32 %v1109, %v623
    %v1112 = vld [vmem:[#allocation10 + $0x8] sm:$0x1]
    %v1113 = vld [vmem:[#allocation10 + $0x9] sm:$0x1]
    %v1114 = vld [vmem:[#allocation10 + $0xa] sm:$0x1]
    %v1115 = vpack.c.bf16 %v1111, %v1110
    %v1116 = vrot.slane %v1110, 4
    %v1117 = vrot.slane %v1111, 4
    %vm1118 = vcmp.lt.s32.totalorder %v116, 4
    %v1119 = vsel %vm1118, %v1116, %v1117
    %v1120 = vsel %vm1118, %v1117, %v1116
    %vm1121 = vcmp.ge.s32.totalorder %v116, 4
    %vm1122 = vcmp.ge.s32.totalorder %v117, 4
    %v1123 = vsel %vm1121, 1, 0
    %v1124 = vsel %vm1122, 1, 0
    %vm1125 = vcmp.eq.s32.totalorder %v1123, 1
    %vm1126 = vcmp.eq.s32.totalorder %v1124, 1
    %v1127 = vsel %vm1125, %v1120, 0.0
    %v1128 = vsel %vm1126, %v1119, 0.0
    %v1129 = vpack.c.bf16 %v1128, %v1127
    %s1130 = scalar_lea.vmem [#allocation8], 96
    %v1131 = vld [vmem:[%s1130] sm:$0xf]
    %v1132 = vld [vmem:[%s1130 + $0x4] sm:$0xf]
    %v1133 = vld [vmem:[%s1130 + $0x8] sm:$0xf]
    %v1134 = vld [vmem:[%s1130 + $0xc] sm:$0xf]
    %v1135 = vld [vmem:[%s1130 + $0x10] sm:$0xf]
    %v1136 = vld [vmem:[%s1130 + $0x14] sm:$0xf]
    %v1137 = vld [vmem:[%s1130 + $0x18] sm:$0xf]
    %v1138 = vld [vmem:[%s1130 + $0x1c] sm:$0xf]
    %s1139 = scalar_lea.vmem [#allocation8], 128
    %v1140 = vld [vmem:[%s1139] sm:$0xf]
    %v1141 = vld [vmem:[%s1139 + $0x4] sm:$0xf]
    %v1142 = vld [vmem:[%s1139 + $0x8] sm:$0xf]
    %v1143 = vld [vmem:[%s1139 + $0xc] sm:$0xf]
    %v1144 = vld [vmem:[%s1139 + $0x10] sm:$0xf]
    %v1145 = vld [vmem:[%s1139 + $0x14] sm:$0xf]
    %v1146 = vld [vmem:[%s1139 + $0x18] sm:$0xf]
    %v1147 = vld [vmem:[%s1139 + $0x1c] sm:$0xf]
    %v1156 = vunpack.c.l.b16 %v1140
    %v1157 = vunpack.c.l.b16 %v1141
    %v1158 = vunpack.c.l.b16 %v1142
    %v1159 = vunpack.c.l.b16 %v1143
    %v1160 = vunpack.c.l.b16 %v1144
    %v1161 = vunpack.c.l.b16 %v1145
    %v1162 = vunpack.c.l.b16 %v1146
    %v1163 = vunpack.c.l.b16 %v1147
    %v1164 = vpack.c.b16 %v1157, %v1156
    %v1165 = vpack.c.b16 %v1159, %v1158
    %v1166 = vpack.c.b16 %v1161, %v1160
    %v1167 = vpack.c.b16 %v1163, %v1162
    %v1173 = vsel %vm343, %v1115, 0
    %1175 = vmatprep.subr.bf16.mxu0 0
    %1176 = vmatpush1.bf16.msra.mxu0 %v1164
    %1177 = vmatprep.subr.bf16.mxu0 0
    %1178 = vmatpush1.bf16.msra.mxu0 %v1165
    %1179 = vmatprep.subr.bf16.mxu0 0
    %1180 = vmatpush1.bf16.msra.mxu0 %v1166
    %1181 = vmatprep.subr.bf16.mxu0 0
    %1182 = vmatpush1.bf16.msra.mxu0 %v1167
    %1183 = vmatprep.subr.bf16.mxu0 0
    %1184 = vmatpush1.bf16.msra.mxu0 0
    %1185 = vmatprep.subr.bf16.mxu0 0
    %1186 = vmatpush1.bf16.msra.mxu0 0
    %1187 = vmatprep.subr.bf16.mxu0 0
    %1188 = vmatpush1.bf16.msra.mxu0 0
    %1189 = vmatprep.subr.bf16.mxu0 0
    %1190 = vmatpush1.bf16.msra.mxu0 0
    %1191 = vmatprep.subr.bf16.mxu0 0
    %1192 = vmatpush1.bf16.msra.mxu0 0
    %1193 = vmatprep.subr.bf16.mxu0 0
    %1194 = vmatpush1.bf16.msra.mxu0 0
    %1195 = vmatprep.subr.bf16.mxu0 0
    %1196 = vmatpush1.bf16.msra.mxu0 0
    %1197 = vmatprep.subr.bf16.mxu0 0
    %1198 = vmatpush1.bf16.msra.mxu0 0
    %1199 = vmatprep.subr.bf16.mxu0 0
    %1200 = vmatpush1.bf16.msra.mxu0 0
    %1201 = vmatprep.subr.bf16.mxu0 0
    %1202 = vmatpush1.bf16.msra.mxu0 0
    %1203 = vmatprep.subr.bf16.mxu0 0
    %1204 = vmatpush1.bf16.msra.mxu0 0
    %1205 = vmatprep.subr.bf16.mxu0 0
    %1206 = vmatpush1.bf16.msra.mxu0 0
    %1207 = vmatprep.mubr.bf16.mxu0 0
    %1208 = vmatmul.mubr.bf16.gmra.mrb[0].mxu0 %v1173
    %v1209 = vpop.f32.mrb[0].mxu0
    %v1210 = vadd.f32 0.0, %v1209
    %v1211 = vpop.f32.mrb[0].mxu0
    %v1212 = vpop.f32.mrb[0].mxu0
    %v1213 = vadd.f32 0.0, %v1212
    %v1214 = vpop.f32.mrb[0].mxu0
    %1215 = vdwg.mxu0
    %v1224 = vunpack.c.l.b16 %v1131
    %v1225 = vunpack.c.l.b16 %v1132
    %v1226 = vunpack.c.l.b16 %v1133
    %v1227 = vunpack.c.l.b16 %v1134
    %v1228 = vunpack.c.l.b16 %v1135
    %v1229 = vunpack.c.l.b16 %v1136
    %v1230 = vunpack.c.l.b16 %v1137
    %v1231 = vunpack.c.l.b16 %v1138
    %v1232 = vpack.c.b16 %v1225, %v1224
    %v1233 = vpack.c.b16 %v1227, %v1226
    %v1234 = vpack.c.b16 %v1229, %v1228
    %v1235 = vpack.c.b16 %v1231, %v1230
    %v1241 = vsel %vm343, %v1129, 0
    %1243 = vmatprep.subr.bf16.mxu0 0
    %1244 = vmatpush1.bf16.msra.mxu0 %v1232
    %1245 = vmatprep.subr.bf16.mxu0 0
    %1246 = vmatpush1.bf16.msra.mxu0 %v1233
    %1247 = vmatprep.subr.bf16.mxu0 0
    %1248 = vmatpush1.bf16.msra.mxu0 %v1234
    %1249 = vmatprep.subr.bf16.mxu0 0
    %1250 = vmatpush1.bf16.msra.mxu0 %v1235
    %1251 = vmatprep.subr.bf16.mxu0 0
    %1252 = vmatpush1.bf16.msra.mxu0 0
    %1253 = vmatprep.subr.bf16.mxu0 0
    %1254 = vmatpush1.bf16.msra.mxu0 0
    %1255 = vmatprep.subr.bf16.mxu0 0
    %1256 = vmatpush1.bf16.msra.mxu0 0
    %1257 = vmatprep.subr.bf16.mxu0 0
    %1258 = vmatpush1.bf16.msra.mxu0 0
    %1259 = vmatprep.subr.bf16.mxu0 0
    %1260 = vmatpush1.bf16.msra.mxu0 0
    %1261 = vmatprep.subr.bf16.mxu0 0
    %1262 = vmatpush1.bf16.msra.mxu0 0
    %1263 = vmatprep.subr.bf16.mxu0 0
    %1264 = vmatpush1.bf16.msra.mxu0 0
    %1265 = vmatprep.subr.bf16.mxu0 0
    %1266 = vmatpush1.bf16.msra.mxu0 0
    %1267 = vmatprep.subr.bf16.mxu0 0
    %1268 = vmatpush1.bf16.msra.mxu0 0
    %1269 = vmatprep.subr.bf16.mxu0 0
    %1270 = vmatpush1.bf16.msra.mxu0 0
    %1271 = vmatprep.subr.bf16.mxu0 0
    %1272 = vmatpush1.bf16.msra.mxu0 0
    %1273 = vmatprep.subr.bf16.mxu0 0
    %1274 = vmatpush1.bf16.msra.mxu0 0
    %1275 = vmatprep.mubr.bf16.mxu0 0
    %1276 = vmatmul.mubr.bf16.gmra.mrb[0].mxu0 %v1241
    %v1277 = vpop.f32.mrb[0].mxu0
    %v1278 = vadd.f32 %v1210, %v1277
    %v1279 = vpop.f32.mrb[0].mxu0
    %v1280 = vpop.f32.mrb[0].mxu0
    %v1281 = vadd.f32 %v1213, %v1280
    %v1282 = vpop.f32.mrb[0].mxu0
    %1283 = vdwg.mxu0
    %vm1284 = vcmp.lt.s32.totalorder %v116, 12
    %vm1285 = vcmp.lt.s32.totalorder %v117, 12
    %v1286 = vsel %vm1284, 1, 0
    %v1287 = vsel %vm1285, 1, 0
    %vm1288 = vcmp.eq.s32.totalorder %v1286, 1
    %vm1289 = vcmp.eq.s32.totalorder %v1287, 1
    %v1290 = vsel %vm1288, %v1119, 0.0
    %v1291 = vsel %vm1289, %v1120, 0.0
    %v1292 = vpack.c.bf16 %v1291, %v1290
    %s1293 = scalar_lea.vmem [#allocation8], 160
    %v1294 = vld [vmem:[%s1293] sm:$0xf]
    %v1295 = vld [vmem:[%s1293 + $0x4] sm:$0xf]
    %v1296 = vld [vmem:[%s1293 + $0x8] sm:$0xf]
    %v1297 = vld [vmem:[%s1293 + $0xc] sm:$0xf]
    %v1298 = vld [vmem:[%s1293 + $0x10] sm:$0xf]
    %v1299 = vld [vmem:[%s1293 + $0x14] sm:$0xf]
    %v1300 = vld [vmem:[%s1293 + $0x18] sm:$0xf]
    %v1301 = vld [vmem:[%s1293 + $0x1c] sm:$0xf]
    %v1310 = vunpack.c.l.b16 %v1294
    %v1311 = vunpack.c.l.b16 %v1295
    %v1312 = vunpack.c.l.b16 %v1296
    %v1313 = vunpack.c.l.b16 %v1297
    %v1314 = vunpack.c.l.b16 %v1298
    %v1315 = vunpack.c.l.b16 %v1299
    %v1316 = vunpack.c.l.b16 %v1300
    %v1317 = vunpack.c.l.b16 %v1301
    %v1318 = vpack.c.b16 %v1311, %v1310
    %v1319 = vpack.c.b16 %v1313, %v1312
    %v1320 = vpack.c.b16 %v1315, %v1314
    %v1321 = vpack.c.b16 %v1317, %v1316
    %v1327 = vsel %vm343, %v1292, 0
    %1329 = vmatprep.subr.bf16.mxu0 0
    %1330 = vmatpush1.bf16.msra.mxu0 %v1318
    %1331 = vmatprep.subr.bf16.mxu0 0
    %1332 = vmatpush1.bf16.msra.mxu0 %v1319
    %1333 = vmatprep.subr.bf16.mxu0 0
    %1334 = vmatpush1.bf16.msra.mxu0 %v1320
    %1335 = vmatprep.subr.bf16.mxu0 0
    %1336 = vmatpush1.bf16.msra.mxu0 %v1321
    %1337 = vmatprep.subr.bf16.mxu0 0
    %1338 = vmatpush1.bf16.msra.mxu0 0
    %1339 = vmatprep.subr.bf16.mxu0 0
    %1340 = vmatpush1.bf16.msra.mxu0 0
    %1341 = vmatprep.subr.bf16.mxu0 0
    %1342 = vmatpush1.bf16.msra.mxu0 0
    %1343 = vmatprep.subr.bf16.mxu0 0
    %1344 = vmatpush1.bf16.msra.mxu0 0
    %1345 = vmatprep.subr.bf16.mxu0 0
    %1346 = vmatpush1.bf16.msra.mxu0 0
    %1347 = vmatprep.subr.bf16.mxu0 0
    %1348 = vmatpush1.bf16.msra.mxu0 0
    %1349 = vmatprep.subr.bf16.mxu0 0
    %1350 = vmatpush1.bf16.msra.mxu0 0
    %1351 = vmatprep.subr.bf16.mxu0 0
    %1352 = vmatpush1.bf16.msra.mxu0 0
    %1353 = vmatprep.subr.bf16.mxu0 0
    %1354 = vmatpush1.bf16.msra.mxu0 0
    %1355 = vmatprep.subr.bf16.mxu0 0
    %1356 = vmatpush1.bf16.msra.mxu0 0
    %1357 = vmatprep.subr.bf16.mxu0 0
    %1358 = vmatpush1.bf16.msra.mxu0 0
    %1359 = vmatprep.subr.bf16.mxu0 0
    %1360 = vmatpush1.bf16.msra.mxu0 0
    %1361 = vmatprep.mubr.bf16.mxu0 0
    %1362 = vmatmul.mubr.bf16.gmra.mrb[0].mxu0 %v1327
    %v1363 = vpop.f32.mrb[0].mxu0
    %v1364 = vadd.f32 0.0, %v1363
    %v1365 = vpop.f32.mrb[0].mxu0
    %v1366 = vpop.f32.mrb[0].mxu0
    %v1367 = vadd.f32 0.0, %v1366
    %v1368 = vpop.f32.mrb[0].mxu0
    %1369 = vdwg.mxu0
    %v1370 = vadd.f32 %v1278, %v1364
    %v1371 = vadd.f32 %v1281, %v1367
    %v1372 = vlaneseq
    %v1373 = vshrl.u32 %v1372, 7
    %v1374 = vsub.s32 0, %v1373
    %v1375 = vrot.slane %v1112, %v1374
    %v1376 = vadd.f32 %v1370, %v1375
    %v1377 = vadd.f32 %v1371, %v1375
    %v1379 = vsel %vm343, %v1376, 0
    %v1382 = vsel %vm343, %v1377, 0
    %1384 = vmatprep.subr.mxu0 0.0
    %1385 = vmatpush1.msra.mxu0 %v107
    %1386 = vmatprep.subr.mxu0 0.0
    %1387 = vmatpush1.msra.mxu0 %v108
    %1388 = vmatprep.subr.mxu0 0.0
    %1389 = vmatpush1.msra.mxu0 %v109
    %1390 = vmatprep.subr.mxu0 0.0
    %1391 = vmatpush1.msra.mxu0 %v110
    %1392 = vmatprep.subr.mxu0 0.0
    %1393 = vmatpush1.msra.mxu0 %v111
    %1394 = vmatprep.subr.mxu0 0.0
    %1395 = vmatpush1.msra.mxu0 %v112
    %1396 = vmatprep.subr.mxu0 0.0
    %1397 = vmatpush1.msra.mxu0 %v113
    %1398 = vmatprep.subr.mxu0 0.0
    %1399 = vmatpush1.msra.mxu0 %v114
    %1400 = vmatprep.subr.mxu0 0.0
    %1401 = vmatpush1.msra.mxu0 0.0
    %1402 = vmatprep.subr.mxu0 0.0
    %1403 = vmatpush1.msra.mxu0 0.0
    %1404 = vmatprep.subr.mxu0 0.0
    %1405 = vmatpush1.msra.mxu0 0.0
    %1406 = vmatprep.subr.mxu0 0.0
    %1407 = vmatpush1.msra.mxu0 0.0
    %1408 = vmatprep.subr.mxu0 0.0
    %1409 = vmatpush1.msra.mxu0 0.0
    %1410 = vmatprep.subr.mxu0 0.0
    %1411 = vmatpush1.msra.mxu0 0.0
    %1412 = vmatprep.subr.mxu0 0.0
    %1413 = vmatpush1.msra.mxu0 0.0
    %1414 = vmatprep.subr.mxu0 0.0
    %1415 = vmatpush1.msra.mxu0 0.0
    %1416 = vmatprep.subr.mxu0 0.0
    %1417 = vmatpush1.msra.mxu0 0.0
    %1418 = vmatprep.subr.mxu0 0.0
    %1419 = vmatpush1.msra.mxu0 0.0
    %1420 = vmatprep.subr.mxu0 0.0
    %1421 = vmatpush1.msra.mxu0 0.0
    %1422 = vmatprep.subr.mxu0 0.0
    %1423 = vmatpush1.msra.mxu0 0.0
    %1424 = vmatprep.subr.mxu0 0.0
    %1425 = vmatpush1.msra.mxu0 0.0
    %1426 = vmatprep.subr.mxu0 0.0
    %1427 = vmatpush1.msra.mxu0 0.0
    %1428 = vmatprep.subr.mxu0 0.0
    %1429 = vmatpush1.msra.mxu0 0.0
    %1430 = vmatprep.subr.mxu0 0.0
    %1431 = vmatpush1.msra.mxu0 0.0
    %1432 = vmatprep.subr.mxu0 0.0
    %1433 = vmatpush1.msra.mxu0 0.0
    %1434 = vmatprep.subr.mxu0 0.0
    %1435 = vmatpush1.msra.mxu0 0.0
    %1436 = vmatprep.subr.mxu0 0.0
    %1437 = vmatpush1.msra.mxu0 0.0
    %1438 = vmatprep.subr.mxu0 0.0
    %1439 = vmatpush1.msra.mxu0 0.0
    %1440 = vmatprep.subr.mxu0 0.0
    %1441 = vmatpush1.msra.mxu0 0.0
    %1442 = vmatprep.subr.mxu0 0.0
    %1443 = vmatpush1.msra.mxu0 0.0
    %1444 = vmatprep.subr.mxu0 0.0
    %1445 = vmatpush1.msra.mxu0 0.0
    %1446 = vmatprep.subr.mxu0 0.0
    %1447 = vmatpush1.msra.mxu0 0.0
    %1448 = vmatprep.mubr.f32.mxu0 0.0
    %1449 = vmatmul.mubr.f32.gmra.mrb[0].mxu0 %v1379
    %v1450 = vpop.f32.mrb[0].mxu0
    %v1451 = vadd.f32 0.0, %v1450
    %v1452 = vpop.f32.mrb[0].mxu0
    %1453 = vmatprep.mubr.f32.mxu0 0.0
    %1454 = vmatmul.mubr.f32.gmra.mrb[0].mxu0 %v1382
    %v1455 = vpop.f32.mrb[0].mxu0
    %v1456 = vadd.f32 0.0, %v1455
    %v1457 = vpop.f32.mrb[0].mxu0
    %1458 = vdwg.mxu0
    %v1459 = vmul.f32 %v1376, %v1376
    %v1460 = vmul.f32 %v1377, %v1377
    %v1462 = vsel %vm343, %v1459, 0
    %v1465 = vsel %vm343, %v1460, 0
    %1467 = vmatprep.subr.mxu0 0.0
    %1468 = vmatpush1.msra.mxu0 %v107
    %1469 = vmatprep.subr.mxu0 0.0
    %1470 = vmatpush1.msra.mxu0 %v108
    %1471 = vmatprep.subr.mxu0 0.0
    %1472 = vmatpush1.msra.mxu0 %v109
    %1473 = vmatprep.subr.mxu0 0.0
    %1474 = vmatpush1.msra.mxu0 %v110
    %1475 = vmatprep.subr.mxu0 0.0
    %1476 = vmatpush1.msra.mxu0 %v111
    %1477 = vmatprep.subr.mxu0 0.0
    %1478 = vmatpush1.msra.mxu0 %v112
    %1479 = vmatprep.subr.mxu0 0.0
    %1480 = vmatpush1.msra.mxu0 %v113
    %1481 = vmatprep.subr.mxu0 0.0
    %1482 = vmatpush1.msra.mxu0 %v114
    %1483 = vmatprep.subr.mxu0 0.0
    %1484 = vmatpush1.msra.mxu0 0.0
    %1485 = vmatprep.subr.mxu0 0.0
    %1486 = vmatpush1.msra.mxu0 0.0
    %1487 = vmatprep.subr.mxu0 0.0
    %1488 = vmatpush1.msra.mxu0 0.0
    %1489 = vmatprep.subr.mxu0 0.0
    %1490 = vmatpush1.msra.mxu0 0.0
    %1491 = vmatprep.subr.mxu0 0.0
    %1492 = vmatpush1.msra.mxu0 0.0
    %1493 = vmatprep.subr.mxu0 0.0
    %1494 = vmatpush1.msra.mxu0 0.0
    %1495 = vmatprep.subr.mxu0 0.0
    %1496 = vmatpush1.msra.mxu0 0.0
    %1497 = vmatprep.subr.mxu0 0.0
    %1498 = vmatpush1.msra.mxu0 0.0
    %1499 = vmatprep.subr.mxu0 0.0
    %1500 = vmatpush1.msra.mxu0 0.0
    %1501 = vmatprep.subr.mxu0 0.0
    %1502 = vmatpush1.msra.mxu0 0.0
    %1503 = vmatprep.subr.mxu0 0.0
    %1504 = vmatpush1.msra.mxu0 0.0
    %1505 = vmatprep.subr.mxu0 0.0
    %1506 = vmatpush1.msra.mxu0 0.0
    %1507 = vmatprep.subr.mxu0 0.0
    %1508 = vmatpush1.msra.mxu0 0.0
    %1509 = vmatprep.subr.mxu0 0.0
    %1510 = vmatpush1.msra.mxu0 0.0
    %1511 = vmatprep.subr.mxu0 0.0
    %1512 = vmatpush1.msra.mxu0 0.0
    %1513 = vmatprep.subr.mxu0 0.0
    %1514 = vmatpush1.msra.mxu0 0.0
    %1515 = vmatprep.subr.mxu0 0.0
    %1516 = vmatpush1.msra.mxu0 0.0
    %1517 = vmatprep.subr.mxu0 0.0
    %1518 = vmatpush1.msra.mxu0 0.0
    %1519 = vmatprep.subr.mxu0 0.0
    %1520 = vmatpush1.msra.mxu0 0.0
    %1521 = vmatprep.subr.mxu0 0.0
    %1522 = vmatpush1.msra.mxu0 0.0
    %1523 = vmatprep.subr.mxu0 0.0
    %1524 = vmatpush1.msra.mxu0 0.0
    %1525 = vmatprep.subr.mxu0 0.0
    %1526 = vmatpush1.msra.mxu0 0.0
    %1527 = vmatprep.subr.mxu0 0.0
    %1528 = vmatpush1.msra.mxu0 0.0
    %1529 = vmatprep.subr.mxu0 0.0
    %1530 = vmatpush1.msra.mxu0 0.0
    %1531 = vmatprep.mubr.f32.mxu0 0.0
    %1532 = vmatmul.mubr.f32.gmra.mrb[0].mxu0 %v1462
    %v1533 = vpop.f32.mrb[0].mxu0
    %v1534 = vadd.f32 0.0, %v1533
    %v1535 = vpop.f32.mrb[0].mxu0
    %1536 = vmatprep.mubr.f32.mxu0 0.0
    %1537 = vmatmul.mubr.f32.gmra.mrb[0].mxu0 %v1465
    %v1538 = vpop.f32.mrb[0].mxu0
    %v1539 = vadd.f32 0.0, %v1538
    %v1540 = vpop.f32.mrb[0].mxu0
    %1541 = vdwg.mxu0
    %v1542 = vsel %vm343, %v1451, 0.0
    %v1543 = vsel %vm343, %v1456, 0.0
    %v1544 = vadd.f32 %v1542, %v1543
    %v1545 = vrot.slane %v1544, 4
    %v1546 = vadd.f32 %v1544, %v1545
    %v1547 = vrot.slane %v1546, 2
    %v1548 = vadd.f32 %v1546, %v1547
    %v1549 = vrot.slane %v1548, 1
    %v1550 = vadd.f32 %v1548, %v1549
    %v1551 = vsel %vm343, %v1534, 0.0
    %v1552 = vsel %vm343, %v1539, 0.0
    %v1553 = vadd.f32 %v1551, %v1552
    %v1554 = vrot.slane %v1553, 4
    %v1555 = vadd.f32 %v1553, %v1554
    %v1556 = vrot.slane %v1555, 2
    %v1557 = vadd.f32 %v1555, %v1556
    %v1558 = vrot.slane %v1557, 1
    %v1559 = vadd.f32 %v1557, %v1558
    %v1560 = vmul.f32 %v1550, %v1550
    %v1561 = vsub.f32 %v1559, %v1560
    %v1562 = vmax.f32 %v1561, 0.0
    %v1563 = vadd.f32 %v1562, 1e-05
    %v1564 = vrsqrt.pop %v1563
    %v1565 = vmul.f32 %v1564, %v1113
    %v1566 = vmul.f32 %v1550, %v1565
    %v1567 = vsub.f32 %v1114, %v1566
    %v1568 = vlaneseq
    %v1569 = vshrl.u32 %v1568, 7
    %v1570 = vsub.s32 0, %v1569
    %v1571 = vrot.slane %v1565, %v1570
    %v1572 = vmul.f32 %v1376, %v1571
    %v1573 = vmul.f32 %v1377, %v1571
    %v1574 = vlaneseq
    %v1575 = vshrl.u32 %v1574, 7
    %v1576 = vsub.s32 0, %v1575
    %v1577 = vrot.slane %v1567, %v1576
    %v1578 = vadd.f32 %v1572, %v1577
    %v1579 = vadd.f32 %v1573, %v1577
    %v1580 = vxor.u32 %v1578, 2147483648
    %v1581 = vxor.u32 %v1579, 2147483648
    %v1582 = vmul.f32 %v1580, 1.442695
    %v1583 = vpow.pop %v1582
    %v1584 = vmul.f32 %v1581, 1.442695
    %v1585 = vpow.pop %v1584
    %v1586 = vadd.f32 %v1583, 1.0
    %v1587 = vadd.f32 %v1585, 1.0
    %v1588 = vrcp.pop %v1586
    %v1589 = vmul.f32 1.0, %v1588
    %v1590 = vrcp.pop %v1587
    %v1591 = vmul.f32 1.0, %v1590
    %v1592 = vmul.f32 %v1578, %v1589
    %v1593 = vmul.f32 %v1579, %v1591
    %v1594 = vadd.f32 %v1592, %v1110
    %v1595 = vadd.f32 %v1593, %v1111
    %v1596 = vld [vmem:[#allocation10 + $0xc] sm:$0x1]
    %v1597 = vld [vmem:[#allocation10 + $0xd] sm:$0x1]
    %v1598 = vld [vmem:[#allocation10 + $0xe] sm:$0x1]
    %v1599 = vpack.c.bf16 %v1595, %v1594
    %vm1600 = vcmp.ge.s32.totalorder %v116, 8
    %vm1601 = vcmp.ge.s32.totalorder %v117, 8
    %v1602 = vsel %vm1600, 1, 0
    %v1603 = vsel %vm1601, 1, 0
    %vm1604 = vcmp.eq.s32.totalorder %v1602, 1
    %vm1605 = vcmp.eq.s32.totalorder %v1603, 1
    %v1606 = vsel %vm1604, %v1595, 0.0
    %v1607 = vsel %vm1605, %v1594, 0.0
    %v1608 = vpack.c.bf16 %v1607, %v1606
    %s1609 = scalar_lea.vmem [#allocation8], 192
    %v1610 = vld [vmem:[%s1609] sm:$0xf]
    %v1611 = vld [vmem:[%s1609 + $0x4] sm:$0xf]
    %v1612 = vld [vmem:[%s1609 + $0x8] sm:$0xf]
    %v1613 = vld [vmem:[%s1609 + $0xc] sm:$0xf]
    %v1614 = vld [vmem:[%s1609 + $0x10] sm:$0xf]
    %v1615 = vld [vmem:[%s1609 + $0x14] sm:$0xf]
    %v1616 = vld [vmem:[%s1609 + $0x18] sm:$0xf]
    %v1617 = vld [vmem:[%s1609 + $0x1c] sm:$0xf]
    %s1618 = scalar_lea.vmem [#allocation8], 224
    %v1619 = vld [vmem:[%s1618] sm:$0xf]
    %v1620 = vld [vmem:[%s1618 + $0x4] sm:$0xf]
    %v1621 = vld [vmem:[%s1618 + $0x8] sm:$0xf]
    %v1622 = vld [vmem:[%s1618 + $0xc] sm:$0xf]
    %v1623 = vld [vmem:[%s1618 + $0x10] sm:$0xf]
    %v1624 = vld [vmem:[%s1618 + $0x14] sm:$0xf]
    %v1625 = vld [vmem:[%s1618 + $0x18] sm:$0xf]
    %v1626 = vld [vmem:[%s1618 + $0x1c] sm:$0xf]
    %v1635 = vunpack.c.l.b16 %v1619
    %v1636 = vunpack.c.l.b16 %v1620
    %v1637 = vunpack.c.l.b16 %v1621
    %v1638 = vunpack.c.l.b16 %v1622
    %v1639 = vunpack.c.l.b16 %v1623
    %v1640 = vunpack.c.l.b16 %v1624
    %v1641 = vunpack.c.l.b16 %v1625
    %v1642 = vunpack.c.l.b16 %v1626
    %v1643 = vpack.c.b16 %v1636, %v1635
    %v1644 = vpack.c.b16 %v1638, %v1637
    %v1645 = vpack.c.b16 %v1640, %v1639
    %v1646 = vpack.c.b16 %v1642, %v1641
    %v1652 = vsel %vm343, %v1599, 0
    %1654 = vmatprep.subr.bf16.mxu0 0
    %1655 = vmatpush1.bf16.msra.mxu0 %v1643
    %1656 = vmatprep.subr.bf16.mxu0 0
    %1657 = vmatpush1.bf16.msra.mxu0 %v1644
    %1658 = vmatprep.subr.bf16.mxu0 0
    %1659 = vmatpush1.bf16.msra.mxu0 %v1645
    %1660 = vmatprep.subr.bf16.mxu0 0
    %1661 = vmatpush1.bf16.msra.mxu0 %v1646
    %1662 = vmatprep.subr.bf16.mxu0 0
    %1663 = vmatpush1.bf16.msra.mxu0 0
    %1664 = vmatprep.subr.bf16.mxu0 0
    %1665 = vmatpush1.bf16.msra.mxu0 0
    %1666 = vmatprep.subr.bf16.mxu0 0
    %1667 = vmatpush1.bf16.msra.mxu0 0
    %1668 = vmatprep.subr.bf16.mxu0 0
    %1669 = vmatpush1.bf16.msra.mxu0 0
    %1670 = vmatprep.subr.bf16.mxu0 0
    %1671 = vmatpush1.bf16.msra.mxu0 0
    %1672 = vmatprep.subr.bf16.mxu0 0
    %1673 = vmatpush1.bf16.msra.mxu0 0
    %1674 = vmatprep.subr.bf16.mxu0 0
    %1675 = vmatpush1.bf16.msra.mxu0 0
    %1676 = vmatprep.subr.bf16.mxu0 0
    %1677 = vmatpush1.bf16.msra.mxu0 0
    %1678 = vmatprep.subr.bf16.mxu0 0
    %1679 = vmatpush1.bf16.msra.mxu0 0
    %1680 = vmatprep.subr.bf16.mxu0 0
    %1681 = vmatpush1.bf16.msra.mxu0 0
    %1682 = vmatprep.subr.bf16.mxu0 0
    %1683 = vmatpush1.bf16.msra.mxu0 0
    %1684 = vmatprep.subr.bf16.mxu0 0
    %1685 = vmatpush1.bf16.msra.mxu0 0
    %1686 = vmatprep.mubr.bf16.mxu0 0
    %1687 = vmatmul.mubr.bf16.gmra.mrb[0].mxu0 %v1652
    %v1688 = vpop.f32.mrb[0].mxu0
    %v1689 = vadd.f32 0.0, %v1688
    %v1690 = vpop.f32.mrb[0].mxu0
    %v1691 = vpop.f32.mrb[0].mxu0
    %v1692 = vadd.f32 0.0, %v1691
    %v1693 = vpop.f32.mrb[0].mxu0
    %1694 = vdwg.mxu0
    %v1703 = vunpack.c.l.b16 %v1610
    %v1704 = vunpack.c.l.b16 %v1611
    %v1705 = vunpack.c.l.b16 %v1612
    %v1706 = vunpack.c.l.b16 %v1613
    %v1707 = vunpack.c.l.b16 %v1614
    %v1708 = vunpack.c.l.b16 %v1615
    %v1709 = vunpack.c.l.b16 %v1616
    %v1710 = vunpack.c.l.b16 %v1617
    %v1711 = vpack.c.b16 %v1704, %v1703
    %v1712 = vpack.c.b16 %v1706, %v1705
    %v1713 = vpack.c.b16 %v1708, %v1707
    %v1714 = vpack.c.b16 %v1710, %v1709
    %v1720 = vsel %vm343, %v1608, 0
    %1722 = vmatprep.subr.bf16.mxu0 0
    %1723 = vmatpush1.bf16.msra.mxu0 %v1711
    %1724 = vmatprep.subr.bf16.mxu0 0
    %1725 = vmatpush1.bf16.msra.mxu0 %v1712
    %1726 = vmatprep.subr.bf16.mxu0 0
    %1727 = vmatpush1.bf16.msra.mxu0 %v1713
    %1728 = vmatprep.subr.bf16.mxu0 0
    %1729 = vmatpush1.bf16.msra.mxu0 %v1714
    %1730 = vmatprep.subr.bf16.mxu0 0
    %1731 = vmatpush1.bf16.msra.mxu0 0
    %1732 = vmatprep.subr.bf16.mxu0 0
    %1733 = vmatpush1.bf16.msra.mxu0 0
    %1734 = vmatprep.subr.bf16.mxu0 0
    %1735 = vmatpush1.bf16.msra.mxu0 0
    %1736 = vmatprep.subr.bf16.mxu0 0
    %1737 = vmatpush1.bf16.msra.mxu0 0
    %1738 = vmatprep.subr.bf16.mxu0 0
    %1739 = vmatpush1.bf16.msra.mxu0 0
    %1740 = vmatprep.subr.bf16.mxu0 0
    %1741 = vmatpush1.bf16.msra.mxu0 0
    %1742 = vmatprep.subr.bf16.mxu0 0
    %1743 = vmatpush1.bf16.msra.mxu0 0
    %1744 = vmatprep.subr.bf16.mxu0 0
    %1745 = vmatpush1.bf16.msra.mxu0 0
    %1746 = vmatprep.subr.bf16.mxu0 0
    %1747 = vmatpush1.bf16.msra.mxu0 0
    %1748 = vmatprep.subr.bf16.mxu0 0
    %1749 = vmatpush1.bf16.msra.mxu0 0
    %1750 = vmatprep.subr.bf16.mxu0 0
    %1751 = vmatpush1.bf16.msra.mxu0 0
    %1752 = vmatprep.subr.bf16.mxu0 0
    %1753 = vmatpush1.bf16.msra.mxu0 0
    %1754 = vmatprep.mubr.bf16.mxu0 0
    %1755 = vmatmul.mubr.bf16.gmra.mrb[0].mxu0 %v1720
    %v1756 = vpop.f32.mrb[0].mxu0
    %v1757 = vadd.f32 %v1689, %v1756
    %v1758 = vpop.f32.mrb[0].mxu0
    %v1759 = vpop.f32.mrb[0].mxu0
    %v1760 = vadd.f32 %v1692, %v1759
    %v1761 = vpop.f32.mrb[0].mxu0
    %1762 = vdwg.mxu0
    %vm1763 = vcmp.lt.s32.totalorder %v116, 8
    %vm1764 = vcmp.lt.s32.totalorder %v117, 8
    %v1765 = vsel %vm1763, 1, 0
    %v1766 = vsel %vm1764, 1, 0
    %vm1767 = vcmp.eq.s32.totalorder %v1765, 1
    %vm1768 = vcmp.eq.s32.totalorder %v1766, 1
    %v1769 = vsel %vm1767, %v1595, 0.0
    %v1770 = vsel %vm1768, %v1594, 0.0
    %v1771 = vpack.c.bf16 %v1770, %v1769
    %s1772 = scalar_lea.vmem [#allocation8], 256
    %v1773 = vld [vmem:[%s1772] sm:$0xf]
    %v1774 = vld [vmem:[%s1772 + $0x4] sm:$0xf]
    %v1775 = vld [vmem:[%s1772 + $0x8] sm:$0xf]
    %v1776 = vld [vmem:[%s1772 + $0xc] sm:$0xf]
    %v1777 = vld [vmem:[%s1772 + $0x10] sm:$0xf]
    %v1778 = vld [vmem:[%s1772 + $0x14] sm:$0xf]
    %v1779 = vld [vmem:[%s1772 + $0x18] sm:$0xf]
    %v1780 = vld [vmem:[%s1772 + $0x1c] sm:$0xf]
    %v1789 = vunpack.c.l.b16 %v1773
    %v1790 = vunpack.c.l.b16 %v1774
    %v1791 = vunpack.c.l.b16 %v1775
    %v1792 = vunpack.c.l.b16 %v1776
    %v1793 = vunpack.c.l.b16 %v1777
    %v1794 = vunpack.c.l.b16 %v1778
    %v1795 = vunpack.c.l.b16 %v1779
    %v1796 = vunpack.c.l.b16 %v1780
    %v1797 = vpack.c.b16 %v1790, %v1789
    %v1798 = vpack.c.b16 %v1792, %v1791
    %v1799 = vpack.c.b16 %v1794, %v1793
    %v1800 = vpack.c.b16 %v1796, %v1795
    %v1806 = vsel %vm343, %v1771, 0
    %1808 = vmatprep.subr.bf16.mxu0 0
    %1809 = vmatpush1.bf16.msra.mxu0 %v1797
    %1810 = vmatprep.subr.bf16.mxu0 0
    %1811 = vmatpush1.bf16.msra.mxu0 %v1798
    %1812 = vmatprep.subr.bf16.mxu0 0
    %1813 = vmatpush1.bf16.msra.mxu0 %v1799
    %1814 = vmatprep.subr.bf16.mxu0 0
    %1815 = vmatpush1.bf16.msra.mxu0 %v1800
    %1816 = vmatprep.subr.bf16.mxu0 0
    %1817 = vmatpush1.bf16.msra.mxu0 0
    %1818 = vmatprep.subr.bf16.mxu0 0
    %1819 = vmatpush1.bf16.msra.mxu0 0
    %1820 = vmatprep.subr.bf16.mxu0 0
    %1821 = vmatpush1.bf16.msra.mxu0 0
    %1822 = vmatprep.subr.bf16.mxu0 0
    %1823 = vmatpush1.bf16.msra.mxu0 0
    %1824 = vmatprep.subr.bf16.mxu0 0
    %1825 = vmatpush1.bf16.msra.mxu0 0
    %1826 = vmatprep.subr.bf16.mxu0 0
    %1827 = vmatpush1.bf16.msra.mxu0 0
    %1828 = vmatprep.subr.bf16.mxu0 0
    %1829 = vmatpush1.bf16.msra.mxu0 0
    %1830 = vmatprep.subr.bf16.mxu0 0
    %1831 = vmatpush1.bf16.msra.mxu0 0
    %1832 = vmatprep.subr.bf16.mxu0 0
    %1833 = vmatpush1.bf16.msra.mxu0 0
    %1834 = vmatprep.subr.bf16.mxu0 0
    %1835 = vmatpush1.bf16.msra.mxu0 0
    %1836 = vmatprep.subr.bf16.mxu0 0
    %1837 = vmatpush1.bf16.msra.mxu0 0
    %1838 = vmatprep.subr.bf16.mxu0 0
    %1839 = vmatpush1.bf16.msra.mxu0 0
    %1840 = vmatprep.mubr.bf16.mxu0 0
    %1841 = vmatmul.mubr.bf16.gmra.mrb[0].mxu0 %v1806
    %v1842 = vpop.f32.mrb[0].mxu0
    %v1843 = vadd.f32 0.0, %v1842
    %v1844 = vpop.f32.mrb[0].mxu0
    %v1845 = vpop.f32.mrb[0].mxu0
    %v1846 = vadd.f32 0.0, %v1845
    %v1847 = vpop.f32.mrb[0].mxu0
    %1848 = vdwg.mxu0
    %v1849 = vadd.f32 %v1757, %v1843
    %v1850 = vadd.f32 %v1760, %v1846
    %v1851 = vlaneseq
    %v1852 = vshrl.u32 %v1851, 7
    %v1853 = vsub.s32 0, %v1852
    %v1854 = vrot.slane %v1596, %v1853
    %v1855 = vadd.f32 %v1849, %v1854
    %v1856 = vadd.f32 %v1850, %v1854
    %v1858 = vsel %vm343, %v1855, 0
    %v1861 = vsel %vm343, %v1856, 0
    %1863 = vmatprep.subr.mxu0 0.0
    %1864 = vmatpush1.msra.mxu0 %v107
    %1865 = vmatprep.subr.mxu0 0.0
    %1866 = vmatpush1.msra.mxu0 %v108
    %1867 = vmatprep.subr.mxu0 0.0
    %1868 = vmatpush1.msra.mxu0 %v109
    %1869 = vmatprep.subr.mxu0 0.0
    %1870 = vmatpush1.msra.mxu0 %v110
    %1871 = vmatprep.subr.mxu0 0.0
    %1872 = vmatpush1.msra.mxu0 %v111
    %1873 = vmatprep.subr.mxu0 0.0
    %1874 = vmatpush1.msra.mxu0 %v112
    %1875 = vmatprep.subr.mxu0 0.0
    %1876 = vmatpush1.msra.mxu0 %v113
    %1877 = vmatprep.subr.mxu0 0.0
    %1878 = vmatpush1.msra.mxu0 %v114
    %1879 = vmatprep.subr.mxu0 0.0
    %1880 = vmatpush1.msra.mxu0 0.0
    %1881 = vmatprep.subr.mxu0 0.0
    %1882 = vmatpush1.msra.mxu0 0.0
    %1883 = vmatprep.subr.mxu0 0.0
    %1884 = vmatpush1.msra.mxu0 0.0
    %1885 = vmatprep.subr.mxu0 0.0
    %1886 = vmatpush1.msra.mxu0 0.0
    %1887 = vmatprep.subr.mxu0 0.0
    %1888 = vmatpush1.msra.mxu0 0.0
    %1889 = vmatprep.subr.mxu0 0.0
    %1890 = vmatpush1.msra.mxu0 0.0
    %1891 = vmatprep.subr.mxu0 0.0
    %1892 = vmatpush1.msra.mxu0 0.0
    %1893 = vmatprep.subr.mxu0 0.0
    %1894 = vmatpush1.msra.mxu0 0.0
    %1895 = vmatprep.subr.mxu0 0.0
    %1896 = vmatpush1.msra.mxu0 0.0
    %1897 = vmatprep.subr.mxu0 0.0
    %1898 = vmatpush1.msra.mxu0 0.0
    %1899 = vmatprep.subr.mxu0 0.0
    %1900 = vmatpush1.msra.mxu0 0.0
    %1901 = vmatprep.subr.mxu0 0.0
    %1902 = vmatpush1.msra.mxu0 0.0
    %1903 = vmatprep.subr.mxu0 0.0
    %1904 = vmatpush1.msra.mxu0 0.0
    %1905 = vmatprep.subr.mxu0 0.0
    %1906 = vmatpush1.msra.mxu0 0.0
    %1907 = vmatprep.subr.mxu0 0.0
    %1908 = vmatpush1.msra.mxu0 0.0
    %1909 = vmatprep.subr.mxu0 0.0
    %1910 = vmatpush1.msra.mxu0 0.0
    %1911 = vmatprep.subr.mxu0 0.0
    %1912 = vmatpush1.msra.mxu0 0.0
    %1913 = vmatprep.subr.mxu0 0.0
    %1914 = vmatpush1.msra.mxu0 0.0
    %1915 = vmatprep.subr.mxu0 0.0
    %1916 = vmatpush1.msra.mxu0 0.0
    %1917 = vmatprep.subr.mxu0 0.0
    %1918 = vmatpush1.msra.mxu0 0.0
    %1919 = vmatprep.subr.mxu0 0.0
    %1920 = vmatpush1.msra.mxu0 0.0
    %1921 = vmatprep.subr.mxu0 0.0
    %1922 = vmatpush1.msra.mxu0 0.0
    %1923 = vmatprep.subr.mxu0 0.0
    %1924 = vmatpush1.msra.mxu0 0.0
    %1925 = vmatprep.subr.mxu0 0.0
    %1926 = vmatpush1.msra.mxu0 0.0
    %1927 = vmatprep.mubr.f32.mxu0 0.0
    %1928 = vmatmul.mubr.f32.gmra.mrb[0].mxu0 %v1858
    %v1929 = vpop.f32.mrb[0].mxu0
    %v1930 = vadd.f32 0.0, %v1929
    %v1931 = vpop.f32.mrb[0].mxu0
    %1932 = vmatprep.mubr.f32.mxu0 0.0
    %1933 = vmatmul.mubr.f32.gmra.mrb[0].mxu0 %v1861
    %v1934 = vpop.f32.mrb[0].mxu0
    %v1935 = vadd.f32 0.0, %v1934
    %v1936 = vpop.f32.mrb[0].mxu0
    %1937 = vdwg.mxu0
    %v1938 = vmul.f32 %v1855, %v1855
    %v1939 = vmul.f32 %v1856, %v1856
    %v1941 = vsel %vm343, %v1938, 0
    %v1944 = vsel %vm343, %v1939, 0
    %1946 = vmatprep.subr.mxu0 0.0
    %1947 = vmatpush1.msra.mxu0 %v107
    %1948 = vmatprep.subr.mxu0 0.0
    %1949 = vmatpush1.msra.mxu0 %v108
    %1950 = vmatprep.subr.mxu0 0.0
    %1951 = vmatpush1.msra.mxu0 %v109
    %1952 = vmatprep.subr.mxu0 0.0
    %1953 = vmatpush1.msra.mxu0 %v110
    %1954 = vmatprep.subr.mxu0 0.0
    %1955 = vmatpush1.msra.mxu0 %v111
    %1956 = vmatprep.subr.mxu0 0.0
    %1957 = vmatpush1.msra.mxu0 %v112
    %1958 = vmatprep.subr.mxu0 0.0
    %1959 = vmatpush1.msra.mxu0 %v113
    %1960 = vmatprep.subr.mxu0 0.0
    %1961 = vmatpush1.msra.mxu0 %v114
    %1962 = vmatprep.subr.mxu0 0.0
    %1963 = vmatpush1.msra.mxu0 0.0
    %1964 = vmatprep.subr.mxu0 0.0
    %1965 = vmatpush1.msra.mxu0 0.0
    %1966 = vmatprep.subr.mxu0 0.0
    %1967 = vmatpush1.msra.mxu0 0.0
    %1968 = vmatprep.subr.mxu0 0.0
    %1969 = vmatpush1.msra.mxu0 0.0
    %1970 = vmatprep.subr.mxu0 0.0
    %1971 = vmatpush1.msra.mxu0 0.0
    %1972 = vmatprep.subr.mxu0 0.0
    %1973 = vmatpush1.msra.mxu0 0.0
    %1974 = vmatprep.subr.mxu0 0.0
    %1975 = vmatpush1.msra.mxu0 0.0
    %1976 = vmatprep.subr.mxu0 0.0
    %1977 = vmatpush1.msra.mxu0 0.0
    %1978 = vmatprep.subr.mxu0 0.0
    %1979 = vmatpush1.msra.mxu0 0.0
    %1980 = vmatprep.subr.mxu0 0.0
    %1981 = vmatpush1.msra.mxu0 0.0
    %1982 = vmatprep.subr.mxu0 0.0
    %1983 = vmatpush1.msra.mxu0 0.0
    %1984 = vmatprep.subr.mxu0 0.0
    %1985 = vmatpush1.msra.mxu0 0.0
    %1986 = vmatprep.subr.mxu0 0.0
    %1987 = vmatpush1.msra.mxu0 0.0
    %1988 = vmatprep.subr.mxu0 0.0
    %1989 = vmatpush1.msra.mxu0 0.0
    %1990 = vmatprep.subr.mxu0 0.0
    %1991 = vmatpush1.msra.mxu0 0.0
    %1992 = vmatprep.subr.mxu0 0.0
    %1993 = vmatpush1.msra.mxu0 0.0
    %1994 = vmatprep.subr.mxu0 0.0
    %1995 = vmatpush1.msra.mxu0 0.0
    %1996 = vmatprep.subr.mxu0 0.0
    %1997 = vmatpush1.msra.mxu0 0.0
    %1998 = vmatprep.subr.mxu0 0.0
    %1999 = vmatpush1.msra.mxu0 0.0
    %2000 = vmatprep.subr.mxu0 0.0
    %2001 = vmatpush1.msra.mxu0 0.0
    %2002 = vmatprep.subr.mxu0 0.0
    %2003 = vmatpush1.msra.mxu0 0.0
    %2004 = vmatprep.subr.mxu0 0.0
    %2005 = vmatpush1.msra.mxu0 0.0
    %2006 = vmatprep.subr.mxu0 0.0
    %2007 = vmatpush1.msra.mxu0 0.0
    %2008 = vmatprep.subr.mxu0 0.0
    %2009 = vmatpush1.msra.mxu0 0.0
    %2010 = vmatprep.mubr.f32.mxu0 0.0
    %2011 = vmatmul.mubr.f32.gmra.mrb[0].mxu0 %v1941
    %v2012 = vpop.f32.mrb[0].mxu0
    %v2013 = vadd.f32 0.0, %v2012
    %v2014 = vpop.f32.mrb[0].mxu0
    %2015 = vmatprep.mubr.f32.mxu0 0.0
    %2016 = vmatmul.mubr.f32.gmra.mrb[0].mxu0 %v1944
    %v2017 = vpop.f32.mrb[0].mxu0
    %v2018 = vadd.f32 0.0, %v2017
    %v2019 = vpop.f32.mrb[0].mxu0
    %2020 = vdwg.mxu0
    %v2021 = vsel %vm343, %v1930, 0.0
    %v2022 = vsel %vm343, %v1935, 0.0
    %v2023 = vadd.f32 %v2021, %v2022
    %v2024 = vrot.slane %v2023, 4
    %v2025 = vadd.f32 %v2023, %v2024
    %v2026 = vrot.slane %v2025, 2
    %v2027 = vadd.f32 %v2025, %v2026
    %v2028 = vrot.slane %v2027, 1
    %v2029 = vadd.f32 %v2027, %v2028
    %v2030 = vsel %vm343, %v2013, 0.0
    %v2031 = vsel %vm343, %v2018, 0.0
    %v2032 = vadd.f32 %v2030, %v2031
    %v2033 = vrot.slane %v2032, 4
    %v2034 = vadd.f32 %v2032, %v2033
    %v2035 = vrot.slane %v2034, 2
    %v2036 = vadd.f32 %v2034, %v2035
    %v2037 = vrot.slane %v2036, 1
    %v2038 = vadd.f32 %v2036, %v2037
    %v2039 = vmul.f32 %v2029, %v2029
    %v2040 = vsub.f32 %v2038, %v2039
    %v2041 = vmax.f32 %v2040, 0.0
    %v2042 = vadd.f32 %v2041, 1e-05
    %v2043 = vrsqrt.pop %v2042
    %v2044 = vmul.f32 %v2043, %v1597
    %v2045 = vmul.f32 %v2029, %v2044
    %v2046 = vsub.f32 %v1598, %v2045
    %v2047 = vlaneseq
    %v2048 = vshrl.u32 %v2047, 7
    %v2049 = vsub.s32 0, %v2048
    %v2050 = vrot.slane %v2044, %v2049
    %v2051 = vmul.f32 %v1855, %v2050
    %v2052 = vmul.f32 %v1856, %v2050
    %v2053 = vlaneseq
    %v2054 = vshrl.u32 %v2053, 7
    %v2055 = vsub.s32 0, %v2054
    %v2056 = vrot.slane %v2046, %v2055
    %v2057 = vadd.f32 %v2051, %v2056
    %v2058 = vadd.f32 %v2052, %v2056
    %v2059 = vxor.u32 %v2057, 2147483648
    %v2060 = vxor.u32 %v2058, 2147483648
    %v2061 = vmul.f32 %v2059, 1.442695
    %v2062 = vpow.pop %v2061
    %v2063 = vmul.f32 %v2060, 1.442695
    %v2064 = vpow.pop %v2063
    %v2065 = vadd.f32 %v2062, 1.0
    %v2066 = vadd.f32 %v2064, 1.0
    %v2067 = vrcp.pop %v2065
    %v2068 = vmul.f32 1.0, %v2067
    %v2069 = vrcp.pop %v2066
    %v2070 = vmul.f32 1.0, %v2069
    %v2071 = vmul.f32 %v2057, %v2068
    %v2072 = vmul.f32 %v2058, %v2070
    %v2073 = vadd.f32 %v2071, %v1594
    %v2074 = vadd.f32 %v2072, %v1595
    %v2075 = vld [vmem:[#allocation10 + $0x10] sm:$0x1]
    %v2076 = vld [vmem:[#allocation10 + $0x11] sm:$0x1]
    %v2077 = vld [vmem:[#allocation10 + $0x12] sm:$0x1]
    %v2078 = vpack.c.bf16 %v2074, %v2073
    %s2079 = scalar_lea.vmem [#allocation8], 320
    %v2080 = vld [vmem:[%s2079] sm:$0xf]
    %v2081 = vld [vmem:[%s2079 + $0x4] sm:$0xf]
    %v2082 = vld [vmem:[%s2079 + $0x8] sm:$0xf]
    %v2083 = vld [vmem:[%s2079 + $0xc] sm:$0xf]
    %v2084 = vld [vmem:[%s2079 + $0x10] sm:$0xf]
    %v2085 = vld [vmem:[%s2079 + $0x14] sm:$0xf]
    %v2086 = vld [vmem:[%s2079 + $0x18] sm:$0xf]
    %v2087 = vld [vmem:[%s2079 + $0x1c] sm:$0xf]
    %v2088 = vlaneseq
    %v2089 = vshrl.u32 %v2088, 7
    %v2090 = vsub.s32 0, %v2089
    %v2091 = vrot.slane %v2075, %v2090
    %v2100 = vunpack.c.l.b16 %v2080
    %v2101 = vunpack.c.l.b16 %v2081
    %v2102 = vunpack.c.l.b16 %v2082
    %v2103 = vunpack.c.l.b16 %v2083
    %v2104 = vunpack.c.l.b16 %v2084
    %v2105 = vunpack.c.l.b16 %v2085
    %v2106 = vunpack.c.l.b16 %v2086
    %v2107 = vunpack.c.l.b16 %v2087
    %v2108 = vpack.c.b16 %v2101, %v2100
    %v2109 = vpack.c.b16 %v2103, %v2102
    %v2110 = vpack.c.b16 %v2105, %v2104
    %v2111 = vpack.c.b16 %v2107, %v2106
    %v2117 = vsel %vm343, %v2078, 0
    %2119 = vmatprep.subr.bf16.mxu0 0
    %2120 = vmatpush1.bf16.msra.mxu0 %v2108
    %2121 = vmatprep.subr.bf16.mxu0 0
    %2122 = vmatpush1.bf16.msra.mxu0 %v2109
    %2123 = vmatprep.subr.bf16.mxu0 0
    %2124 = vmatpush1.bf16.msra.mxu0 %v2110
    %2125 = vmatprep.subr.bf16.mxu0 0
    %2126 = vmatpush1.bf16.msra.mxu0 %v2111
    %2127 = vmatprep.subr.bf16.mxu0 0
    %2128 = vmatpush1.bf16.msra.mxu0 0
    %2129 = vmatprep.subr.bf16.mxu0 0
    %2130 = vmatpush1.bf16.msra.mxu0 0
    %2131 = vmatprep.subr.bf16.mxu0 0
    %2132 = vmatpush1.bf16.msra.mxu0 0
    %2133 = vmatprep.subr.bf16.mxu0 0
    %2134 = vmatpush1.bf16.msra.mxu0 0
    %2135 = vmatprep.subr.bf16.mxu0 0
    %2136 = vmatpush1.bf16.msra.mxu0 0
    %2137 = vmatprep.subr.bf16.mxu0 0
    %2138 = vmatpush1.bf16.msra.mxu0 0
    %2139 = vmatprep.subr.bf16.mxu0 0
    %2140 = vmatpush1.bf16.msra.mxu0 0
    %2141 = vmatprep.subr.bf16.mxu0 0
    %2142 = vmatpush1.bf16.msra.mxu0 0
    %2143 = vmatprep.subr.bf16.mxu0 0
    %2144 = vmatpush1.bf16.msra.mxu0 0
    %2145 = vmatprep.subr.bf16.mxu0 0
    %2146 = vmatpush1.bf16.msra.mxu0 0
    %2147 = vmatprep.subr.bf16.mxu0 0
    %2148 = vmatpush1.bf16.msra.mxu0 0
    %2149 = vmatprep.subr.bf16.mxu0 0
    %2150 = vmatpush1.bf16.msra.mxu0 0
    %2151 = vmatprep.mubr.bf16.mxu0 0
    %2152 = vmatmul.mubr.bf16.gmra.mrb[0].mxu0 %v2117
    %v2153 = vpop.f32.mrb[0].mxu0
    %v2154 = vadd.f32 %v2091, %v2153
    %v2155 = vpop.f32.mrb[0].mxu0
    %v2156 = vpop.f32.mrb[0].mxu0
    %v2157 = vadd.f32 %v2091, %v2156
    %v2158 = vpop.f32.mrb[0].mxu0
    %2159 = vdwg.mxu0
    %v2161 = vsel %vm343, %v2154, 0
    %v2164 = vsel %vm343, %v2157, 0
    %2166 = vmatprep.subr.mxu0 0.0
    %2167 = vmatpush1.msra.mxu0 %v107
    %2168 = vmatprep.subr.mxu0 0.0
    %2169 = vmatpush1.msra.mxu0 %v108
    %2170 = vmatprep.subr.mxu0 0.0
    %2171 = vmatpush1.msra.mxu0 %v109
    %2172 = vmatprep.subr.mxu0 0.0
    %2173 = vmatpush1.msra.mxu0 %v110
    %2174 = vmatprep.subr.mxu0 0.0
    %2175 = vmatpush1.msra.mxu0 %v111
    %2176 = vmatprep.subr.mxu0 0.0
    %2177 = vmatpush1.msra.mxu0 %v112
    %2178 = vmatprep.subr.mxu0 0.0
    %2179 = vmatpush1.msra.mxu0 %v113
    %2180 = vmatprep.subr.mxu0 0.0
    %2181 = vmatpush1.msra.mxu0 %v114
    %2182 = vmatprep.subr.mxu0 0.0
    %2183 = vmatpush1.msra.mxu0 0.0
    %2184 = vmatprep.subr.mxu0 0.0
    %2185 = vmatpush1.msra.mxu0 0.0
    %2186 = vmatprep.subr.mxu0 0.0
    %2187 = vmatpush1.msra.mxu0 0.0
    %2188 = vmatprep.subr.mxu0 0.0
    %2189 = vmatpush1.msra.mxu0 0.0
    %2190 = vmatprep.subr.mxu0 0.0
    %2191 = vmatpush1.msra.mxu0 0.0
    %2192 = vmatprep.subr.mxu0 0.0
    %2193 = vmatpush1.msra.mxu0 0.0
    %2194 = vmatprep.subr.mxu0 0.0
    %2195 = vmatpush1.msra.mxu0 0.0
    %2196 = vmatprep.subr.mxu0 0.0
    %2197 = vmatpush1.msra.mxu0 0.0
    %2198 = vmatprep.subr.mxu0 0.0
    %2199 = vmatpush1.msra.mxu0 0.0
    %2200 = vmatprep.subr.mxu0 0.0
    %2201 = vmatpush1.msra.mxu0 0.0
    %2202 = vmatprep.subr.mxu0 0.0
    %2203 = vmatpush1.msra.mxu0 0.0
    %2204 = vmatprep.subr.mxu0 0.0
    %2205 = vmatpush1.msra.mxu0 0.0
    %2206 = vmatprep.subr.mxu0 0.0
    %2207 = vmatpush1.msra.mxu0 0.0
    %2208 = vmatprep.subr.mxu0 0.0
    %2209 = vmatpush1.msra.mxu0 0.0
    %2210 = vmatprep.subr.mxu0 0.0
    %2211 = vmatpush1.msra.mxu0 0.0
    %2212 = vmatprep.subr.mxu0 0.0
    %2213 = vmatpush1.msra.mxu0 0.0
    %2214 = vmatprep.subr.mxu0 0.0
    %2215 = vmatpush1.msra.mxu0 0.0
    %2216 = vmatprep.subr.mxu0 0.0
    %2217 = vmatpush1.msra.mxu0 0.0
    %2218 = vmatprep.subr.mxu0 0.0
    %2219 = vmatpush1.msra.mxu0 0.0
    %2220 = vmatprep.subr.mxu0 0.0
    %2221 = vmatpush1.msra.mxu0 0.0
    %2222 = vmatprep.subr.mxu0 0.0
    %2223 = vmatpush1.msra.mxu0 0.0
    %2224 = vmatprep.subr.mxu0 0.0
    %2225 = vmatpush1.msra.mxu0 0.0
    %2226 = vmatprep.subr.mxu0 0.0
    %2227 = vmatpush1.msra.mxu0 0.0
    %2228 = vmatprep.subr.mxu0 0.0
    %2229 = vmatpush1.msra.mxu0 0.0
    %2230 = vmatprep.mubr.f32.mxu0 0.0
    %2231 = vmatmul.mubr.f32.gmra.mrb[0].mxu0 %v2161
    %v2232 = vpop.f32.mrb[0].mxu0
    %v2233 = vadd.f32 0.0, %v2232
    %v2234 = vpop.f32.mrb[0].mxu0
    %2235 = vmatprep.mubr.f32.mxu0 0.0
    %2236 = vmatmul.mubr.f32.gmra.mrb[0].mxu0 %v2164
    %v2237 = vpop.f32.mrb[0].mxu0
    %v2238 = vadd.f32 0.0, %v2237
    %v2239 = vpop.f32.mrb[0].mxu0
    %2240 = vdwg.mxu0
    %v2241 = vmul.f32 %v2154, %v2154
    %v2242 = vmul.f32 %v2157, %v2157
    %v2244 = vsel %vm343, %v2241, 0
    %v2247 = vsel %vm343, %v2242, 0
    %2249 = vmatprep.subr.mxu0 0.0
    %2250 = vmatpush1.msra.mxu0 %v107
    %2251 = vmatprep.subr.mxu0 0.0
    %2252 = vmatpush1.msra.mxu0 %v108
    %2253 = vmatprep.subr.mxu0 0.0
    %2254 = vmatpush1.msra.mxu0 %v109
    %2255 = vmatprep.subr.mxu0 0.0
    %2256 = vmatpush1.msra.mxu0 %v110
    %2257 = vmatprep.subr.mxu0 0.0
    %2258 = vmatpush1.msra.mxu0 %v111
    %2259 = vmatprep.subr.mxu0 0.0
    %2260 = vmatpush1.msra.mxu0 %v112
    %2261 = vmatprep.subr.mxu0 0.0
    %2262 = vmatpush1.msra.mxu0 %v113
    %2263 = vmatprep.subr.mxu0 0.0
    %2264 = vmatpush1.msra.mxu0 %v114
    %2265 = vmatprep.subr.mxu0 0.0
    %2266 = vmatpush1.msra.mxu0 0.0
    %2267 = vmatprep.subr.mxu0 0.0
    %2268 = vmatpush1.msra.mxu0 0.0
    %2269 = vmatprep.subr.mxu0 0.0
    %2270 = vmatpush1.msra.mxu0 0.0
    %2271 = vmatprep.subr.mxu0 0.0
    %2272 = vmatpush1.msra.mxu0 0.0
    %2273 = vmatprep.subr.mxu0 0.0
    %2274 = vmatpush1.msra.mxu0 0.0
    %2275 = vmatprep.subr.mxu0 0.0
    %2276 = vmatpush1.msra.mxu0 0.0
    %2277 = vmatprep.subr.mxu0 0.0
    %2278 = vmatpush1.msra.mxu0 0.0
    %2279 = vmatprep.subr.mxu0 0.0
    %2280 = vmatpush1.msra.mxu0 0.0
    %2281 = vmatprep.subr.mxu0 0.0
    %2282 = vmatpush1.msra.mxu0 0.0
    %2283 = vmatprep.subr.mxu0 0.0
    %2284 = vmatpush1.msra.mxu0 0.0
    %2285 = vmatprep.subr.mxu0 0.0
    %2286 = vmatpush1.msra.mxu0 0.0
    %2287 = vmatprep.subr.mxu0 0.0
    %2288 = vmatpush1.msra.mxu0 0.0
    %2289 = vmatprep.subr.mxu0 0.0
    %2290 = vmatpush1.msra.mxu0 0.0
    %2291 = vmatprep.subr.mxu0 0.0
    %2292 = vmatpush1.msra.mxu0 0.0
    %2293 = vmatprep.subr.mxu0 0.0
    %2294 = vmatpush1.msra.mxu0 0.0
    %2295 = vmatprep.subr.mxu0 0.0
    %2296 = vmatpush1.msra.mxu0 0.0
    %2297 = vmatprep.subr.mxu0 0.0
    %2298 = vmatpush1.msra.mxu0 0.0
    %2299 = vmatprep.subr.mxu0 0.0
    %2300 = vmatpush1.msra.mxu0 0.0
    %2301 = vmatprep.subr.mxu0 0.0
    %2302 = vmatpush1.msra.mxu0 0.0
    %2303 = vmatprep.subr.mxu0 0.0
    %2304 = vmatpush1.msra.mxu0 0.0
    %2305 = vmatprep.subr.mxu0 0.0
    %2306 = vmatpush1.msra.mxu0 0.0
    %2307 = vmatprep.subr.mxu0 0.0
    %2308 = vmatpush1.msra.mxu0 0.0
    %2309 = vmatprep.subr.mxu0 0.0
    %2310 = vmatpush1.msra.mxu0 0.0
    %2311 = vmatprep.subr.mxu0 0.0
    %2312 = vmatpush1.msra.mxu0 0.0
    %2313 = vmatprep.mubr.f32.mxu0 0.0
    %2314 = vmatmul.mubr.f32.gmra.mrb[0].mxu0 %v2244
    %v2315 = vpop.f32.mrb[0].mxu0
    %v2316 = vadd.f32 0.0, %v2315
    %v2317 = vpop.f32.mrb[0].mxu0
    %2318 = vmatprep.mubr.f32.mxu0 0.0
    %2319 = vmatmul.mubr.f32.gmra.mrb[0].mxu0 %v2247
    %v2320 = vpop.f32.mrb[0].mxu0
    %v2321 = vadd.f32 0.0, %v2320
    %v2322 = vpop.f32.mrb[0].mxu0
    %2323 = vdwg.mxu0
    %v2324 = vsel %vm343, %v2233, 0.0
    %v2325 = vsel %vm343, %v2238, 0.0
    %v2326 = vadd.f32 %v2324, %v2325
    %v2327 = vrot.slane %v2326, 4
    %v2328 = vadd.f32 %v2326, %v2327
    %v2329 = vrot.slane %v2328, 2
    %v2330 = vadd.f32 %v2328, %v2329
    %v2331 = vrot.slane %v2330, 1
    %v2332 = vadd.f32 %v2330, %v2331
    %v2333 = vsel %vm343, %v2316, 0.0
    %v2334 = vsel %vm343, %v2321, 0.0
    %v2335 = vadd.f32 %v2333, %v2334
    %v2336 = vrot.slane %v2335, 4
    %v2337 = vadd.f32 %v2335, %v2336
    %v2338 = vrot.slane %v2337, 2
    %v2339 = vadd.f32 %v2337, %v2338
    %v2340 = vrot.slane %v2339, 1
    %v2341 = vadd.f32 %v2339, %v2340
    %v2342 = vmul.f32 %v2332, %v2332
    %v2343 = vsub.f32 %v2341, %v2342
    %v2344 = vmax.f32 %v2343, 0.0
    %v2345 = vadd.f32 %v2344, 1e-05
    %v2346 = vrsqrt.pop %v2345
    %v2347 = vmul.f32 %v2346, %v2076
    %v2348 = vmul.f32 %v2332, %v2347
    %v2349 = vsub.f32 %v2077, %v2348
    %v2350 = vlaneseq
    %v2351 = vshrl.u32 %v2350, 7
    %v2352 = vsub.s32 0, %v2351
    %v2353 = vrot.slane %v2347, %v2352
    %v2354 = vmul.f32 %v2154, %v2353
    %v2355 = vmul.f32 %v2157, %v2353
    %v2356 = vlaneseq
    %v2357 = vshrl.u32 %v2356, 7
    %v2358 = vsub.s32 0, %v2357
    %v2359 = vrot.slane %v2349, %v2358
    %v2360 = vadd.f32 %v2354, %v2359
    %v2361 = vadd.f32 %v2355, %v2359
    %v2362 = vxor.u32 %v2360, 2147483648
    %v2363 = vxor.u32 %v2361, 2147483648
    %v2364 = vmul.f32 %v2362, 1.442695
    %v2365 = vpow.pop %v2364
    %v2366 = vmul.f32 %v2363, 1.442695
    %v2367 = vpow.pop %v2366
    %v2368 = vadd.f32 %v2365, 1.0
    %v2369 = vadd.f32 %v2367, 1.0
    %v2370 = vrcp.pop %v2368
    %v2371 = vmul.f32 1.0, %v2370
    %v2372 = vrcp.pop %v2369
    %v2373 = vmul.f32 1.0, %v2372
    %v2374 = vmul.f32 %v2360, %v2371
    %v2375 = vmul.f32 %v2361, %v2373
    %v2376 = vadd.f32 %v2374, %v2073
    %v2377 = vadd.f32 %v2375, %v2074
    %2378 = vst.msk [vmem:[#allocation13] sm:$0xff] %vm343, %v2376
    %2379 = vst.msk [vmem:[#allocation13 + $0x8] sm:$0xff] %vm343, %v2377
    // Predicated region
    $region50: #{tpu_custom_call.1} parent=1 // pred_check
      _
    $region51: #{tpu_custom_call.1} parent=1 // pred_check_branch
      %2381 = sbr.rel (0) target = $region53
    $region52: #{tpu_custom_call.1} parent=1 // pred_region
      %s2383 = ssub.s32 256, 256
      %2384 = vsyncadd [#allocation4], %s2383
      %s2385 = sshll.u32 [#allocation13], 4
      %s2386 = int_to_ptr.vmem [resolvable:$true] %s2385
      %2391 = dma.vmem_to_hbm [thread:$0]  %s2386, 256, %s6, [#allocation4], 128, 128, 8
    $region53: #{tpu_custom_call.1} parent=1 // pred_fallthru
      _
    // Predicated region
    $region54: #{tpu_custom_call.1} parent=1 // pred_check
      _
    $region55: #{tpu_custom_call.1} parent=1 // pred_check_branch
      %2393 = sbr.rel (0) target = $region57
    $region56: #{tpu_custom_call.1} parent=1 // pred_region
      %2394 = dma.done [#allocation4], 256
    $region57: #{tpu_custom_call.1} parent=1 // pred_fallthru
      _
    %2395 = vsyncpa [#allocation3], 1
    %2396 = vsyncpa [#allocation6], 1
    %2397 = vsyncpa [#allocation9], 1
    %2398 = vsyncpa [#allocation12], 1
    %2399 = vsyncpa [#allocation4], 1

</llo_original>
